<compile_context>
chip_gen: v5e
topology: v5e:2x2
jax: 0.10.0
libtpu: 0.0.40
codegen_flags: <defaults>
</compile_context>

<pallas_src>
import functools
import math

import jax
import jax.numpy as jnp
from jax.experimental import pallas as pl
from jax.experimental.pallas import tpu as pltpu


def _round_up(v, m):
    return (v + m - 1) // m * m


# ---------------------------------------------------------------------------
# Fused GCN layer kernel:  out = adj @ (X @ W) + b   (optional ReLU)
#   grid = (row tiles, K tiles); K is the reduction axis (VMEM f32 accumulator).
#   adj block:  (tm, tk)       streamed, auto double-buffered
#   X   block:  (tk, fin)      streamed (narrow-lane operand)
#   W:          (fin, fout)    VMEM-resident (tiny)
#   b:          (1, fout)      VMEM-resident
# ---------------------------------------------------------------------------
def _make_gcn_layer_kernel(apply_relu):
    def kernel(adj_ref, x_ref, w_ref, b_ref, out_ref, acc_ref):
        k = pl.program_id(1)

        @pl.when(k == 0)
        def _():
            acc_ref[...] = jnp.zeros_like(acc_ref)

        # Recompute the (tk, fout) support tile from the (tk, fin) X block.
        # W is VMEM-resident so this costs only ~fin/tm extra MXU work and
        # avoids round-tripping / re-streaming the 128-lane support via HBM.
        s = jnp.dot(
            x_ref[...], w_ref[...], preferred_element_type=jnp.float32
        ).astype(jnp.bfloat16)
        acc_ref[...] += jnp.dot(
            adj_ref[...], s, preferred_element_type=jnp.float32
        )

        @pl.when(k == pl.num_programs(1) - 1)
        def _():
            r = acc_ref[...] + b_ref[...]          # bias applied exactly once
            if apply_relu:
                r = jnp.maximum(r, 0.0)
            out_ref[...] = r.astype(out_ref.dtype)

    return kernel


def _gcn_layer(adj, x, w, b, *, tm, tk, apply_relu, out_dtype):
    n = adj.shape[0]
    fin = x.shape[1]
    fout = w.shape[1]

    flops = 2 * n * n * fout + 2 * (n // tm) * n * fin * fout
    bytes_accessed = (
        n * n * 2                              # adj stream (bf16)
        + (n // tm) * n * fin * 2              # X re-streamed once per row tile
        + w.size * 2
        + b.size * 4
        + n * fout * jnp.dtype(out_dtype).itemsize
    )

    return pl.pallas_call(
        _make_gcn_layer_kernel(apply_relu),
        out_shape=jax.ShapeDtypeStruct((n, fout), out_dtype),
        grid_spec=pltpu.PrefetchScalarGridSpec(
            num_scalar_prefetch=0,
            grid=(n // tm, n // tk),
            in_specs=[
                # adj row/col block.  (pipeline_mode=pl.Buffered(3) only if a
                # profile shows exposed DMA at the finalize boundary.)
                pl.BlockSpec((tm, tk), lambda i, k: (i, k)),
                pl.BlockSpec((tk, fin), lambda i, k: (k, 0)),   # X rows
                pl.BlockSpec((fin, fout), lambda i, k: (0, 0)), # W (resident)
                pl.BlockSpec((1, fout), lambda i, k: (0, 0)),   # bias (resident)
            ],
            out_specs=pl.BlockSpec((tm, fout), lambda i, k: (i, 0)),
            scratch_shapes=[pltpu.VMEM((tm, fout), jnp.float32)],
        ),
        compiler_params=pltpu.CompilerParams(
            dimension_semantics=("parallel", "arbitrary"),
            vmem_limit_bytes=32 * 1024 * 1024,   # actual use ~1 MiB; fine on v7x 64 MiB
        ),
        cost_estimate=pl.CostEstimate(
            flops=flops, transcendentals=0, bytes_accessed=bytes_accessed
        ),
    )(adj, x, w, b)


# ---------------------------------------------------------------------------
# Full GCN forward (eval mode), jitted end-to-end so pad/cast/slice glue fuses.
# ---------------------------------------------------------------------------
@functools.partial(jax.jit, static_argnames=("tm", "tk"))
def gcn_forward(x, adj, w1, b1, w2, b2, tm=None, tk=None):
    n, _ = x.shape
    hidden = w1.shape[1]
    out_size = w2.shape[1]

    hpad = _round_up(hidden, 128)
    opad = _round_up(out_size, 128)

    if tm is None or tk is None:
        # 256-aligned tiles (v6e/v7x 2x256 MXU, amortizes per-step overhead),
        # but keep >= 2 row tiles so both v7x TensorCores get work.
        t = 256 if _round_up(n, 256) >= 512 else 128
        tm = tm or t
        tk = tk or t
    npad = _round_up(n, math.lcm(tm, tk))

    # Zero-pad N (rows of x, both dims of adj) and the feature dims to 128
    # lanes; cast matmul operands to bf16 (f32 accumulation inside the MXU).
    # Padding the normalized adjacency with zeros is exact: padded rows/cols
    # contribute nothing and padded outputs are sliced off below.
    xp = jnp.pad(x, ((0, npad - n), (0, 0))).astype(jnp.bfloat16)
    adjb = jnp.pad(adj, ((0, npad - n), (0, npad - n))).astype(jnp.bfloat16)
    w1p = jnp.pad(w1, ((0, 0), (0, hpad - hidden))).astype(jnp.bfloat16)
    b1p = jnp.pad(b1, ((0, 0), (0, hpad - hidden))).astype(jnp.float32)
    w2p = jnp.pad(w2, ((0, hpad - hidden), (0, opad - out_size))).astype(jnp.bfloat16)
    b2p = jnp.pad(b2, ((0, 0), (0, opad - out_size))).astype(jnp.float32)

    # Layer 1 (fused): h = relu(adj @ (x @ W1) + b1)        -> [npad, hpad] bf16
    h = _gcn_layer(adjb, xp, w1p, b1p, tm=tm, tk=tk,
                   apply_relu=True, out_dtype=jnp.bfloat16)

    # (dropout: identity in eval mode)

    # Layer 2 (fused): y = adj @ (h @ W2) + b2               -> [npad, opad] f32
    y = _gcn_layer(adjb, h, w2p, b2p, tm=tm, tk=tk,
                   apply_relu=False, out_dtype=jnp.float32)

    return y[:n, :out_size]


def init_params(key, in_size, hidden_size, out_size):
    # Kipf GraphConvolution init: U(-1/sqrt(fan_out), 1/sqrt(fan_out))
    k1, k2, k3, k4 = jax.random.split(key, 4)
    s1 = 1.0 / jnp.sqrt(hidden_size)
    s2 = 1.0 / jnp.sqrt(out_size)
    w1 = jax.random.uniform(k1, (in_size, hidden_size), jnp.float32, -s1, s1)
    b1 = jax.random.uniform(k2, (1, hidden_size), jnp.float32, -s1, s1)
    w2 = jax.random.uniform(k3, (hidden_size, out_size), jnp.float32, -s2, s2)
    b2 = jax.random.uniform(k4, (1, out_size), jnp.float32, -s2, s2)
    return w1, b1, w2, b2


if __name__ == "__main__":
    # 512 nodes (=> 2x2 grid of 256-tiles), in=16 features, hidden=32, out=8.
    N, in_size, hidden_size, out_size = 512, 16, 32, 8

    key = jax.random.PRNGKey(0)
    kx, kadj, kp = jax.random.split(key, 3)

    x = jax.random.normal(kx, (N, in_size), jnp.float32)

    # Symmetric normalized adjacency with self-loops (typical GCN input).
    a = (jax.random.uniform(kadj, (N, N)) < 0.05).astype(jnp.float32)
    a = jnp.maximum(a, a.T) + jnp.eye(N, dtype=jnp.float32)
    deg = jnp.sum(a, axis=1)
    d_inv_sqrt = 1.0 / jnp.sqrt(deg)
    adj = a * d_inv_sqrt[:, None] * d_inv_sqrt[None, :]

    w1, b1, w2, b2 = init_params(kp, in_size, hidden_size, out_size)

    out = gcn_forward(x, adj, w1, b1, w2, b2)
    out = jax.block_until_ready(out)

    # Pure-JAX reference mimicking the kernel's bf16-operand / f32-accumulate math.
    def q(v):
        return v.astype(jnp.bfloat16).astype(jnp.float32)

    s1_ref = q(q(x) @ q(w1))
    h_ref = jnp.maximum(q(adj) @ s1_ref + b1, 0.0)
    s2_ref = q(q(h_ref) @ q(w2))
    out_ref = q(adj) @ s2_ref + b2

    assert out.shape == (N, out_size)
    err = float(jnp.max(jnp.abs(out - out_ref)))
    assert jnp.allclose(out, out_ref, atol=2e-2, rtol=2e-2), f"max abs err {err}"

    print("KERNEL_OK")
</pallas_src>

<mosaic_0001>
module attributes {stable_mosaic.version = 11 : i64} {
  func.func @kernel(%arg0: i32, %arg1: i32, %arg2: memref<256x256xbf16, #tpu.memory_space<vmem>>, %arg3: memref<256x128xbf16, #tpu.memory_space<vmem>>, %arg4: memref<128x128xbf16, #tpu.memory_space<vmem>>, %arg5: memref<1x128xf32, #tpu.memory_space<vmem>>, %arg6: memref<256x128xf32, #tpu.memory_space<vmem>>, %arg7: memref<256x128xf32, #tpu.memory_space<vmem>>) attributes {dimension_semantics = [#tpu.dimension_semantics<parallel>, #tpu.dimension_semantics<arbitrary>], iteration_bounds = array<i64: 2, 2>, scalar_prefetch = 0 : i64, scratch_operands = 1 : i64, tpu.core_type = #tpu.core_type<tc>, window_params = [{transform_indices = @transform_0, window_bounds = array<i64: 256, 256>}, {transform_indices = @transform_1, window_bounds = array<i64: 256, 128>}, {pipeline_mode = #tpu.pipeline_mode<synchronous>, transform_indices = @transform_2, window_bounds = array<i64: 128, 128>}, {pipeline_mode = #tpu.pipeline_mode<synchronous>, transform_indices = @transform_3, window_bounds = array<i64: 1, 128>}, {transform_indices = @transform_4, window_bounds = array<i64: 256, 128>}]} {
    %c0_i32 = arith.constant 0 : i32
    %0 = arith.cmpi eq, %arg1, %c0_i32 : i32
    %1 = arith.extui %0 : i1 to i32
    %c0_i32_0 = arith.constant 0 : i32
    %2 = arith.cmpi ne, %1, %c0_i32_0 : i32
    scf.if %2 {
      %cst_12 = arith.constant 0.000000e+00 : f32
      %15 = vector.broadcast %cst_12 : f32 to vector<256x128xf32>
      %c0_13 = arith.constant 0 : index
      %c0_14 = arith.constant 0 : index
      %16 = vector.load %arg7[%c0_13, %c0_14] : memref<256x128xf32, #tpu.memory_space<vmem>>, vector<256x128xf32>
      tpu.vector_store %arg7[%c0_13, %c0_14], %15 {strides = array<i32>} : memref<256x128xf32, #tpu.memory_space<vmem>>, vector<256x128xf32>,
    } else {
    }
    %c0 = arith.constant 0 : index
    %c0_1 = arith.constant 0 : index
    %3 = vector.load %arg3[%c0, %c0_1] : memref<256x128xbf16, #tpu.memory_space<vmem>>, vector<256x128xbf16>
    %c0_2 = arith.constant 0 : index
    %c0_3 = arith.constant 0 : index
    %4 = vector.load %arg4[%c0_2, %c0_3] : memref<128x128xbf16, #tpu.memory_space<vmem>>, vector<128x128xbf16>
    %cst = arith.constant dense<0.000000e+00> : vector<256x128xf32>
    %5 = tpu.matmul %3, %4, %cst {dimension_numbers = #tpu.dot_dimension_numbers<[1], [0], [0], [1], [0, 0, 1, 1], [], []>} : vector<256x128xbf16>, vector<128x128xbf16>, vector<256x128xf32> -> vector<256x128xf32>
    %6 = arith.truncf %5 : vector<256x128xf32> to vector<256x128xbf16>
    %c0_4 = arith.constant 0 : index
    %c0_5 = arith.constant 0 : index
    %7 = vector.load %arg7[%c0_4, %c0_5] : memref<256x128xf32, #tpu.memory_space<vmem>>, vector<256x128xf32>
    %c0_6 = arith.constant 0 : index
    %c0_7 = arith.constant 0 : index
    %8 = vector.load %arg2[%c0_6, %c0_7] : memref<256x256xbf16, #tpu.memory_space<vmem>>, vector<256x256xbf16>
    %cst_8 = arith.constant dense<0.000000e+00> : vector<256x128xf32>
    %9 = tpu.matmul %8, %6, %cst_8 {dimension_numbers = #tpu.dot_dimension_numbers<[1], [0], [0], [1], [0, 0, 1, 1], [], []>} : vector<256x256xbf16>, vector<256x128xbf16>, vector<256x128xf32> -> vector<256x128xf32>
    %10 = arith.addf %7, %9 : vector<256x128xf32>
    %c0_9 = arith.constant 0 : index
    %c0_10 = arith.constant 0 : index
    %11 = vector.load %arg7[%c0_9, %c0_10] : memref<256x128xf32, #tpu.memory_space<vmem>>, vector<256x128xf32>
    tpu.vector_store %arg7[%c0_9, %c0_10], %10 {strides = array<i32>} : memref<256x128xf32, #tpu.memory_space<vmem>>, vector<256x128xf32>,
    %c1_i32 = arith.constant 1 : i32
    %12 = arith.cmpi eq, %arg1, %c1_i32 : i32
    %13 = arith.extui %12 : i1 to i32
    %c0_i32_11 = arith.constant 0 : i32
    %14 = arith.cmpi ne, %13, %c0_i32_11 : i32
    scf.if %14 {
      %c0_12 = arith.constant 0 : index
      %c0_13 = arith.constant 0 : index
      %15 = vector.load %arg7[%c0_12, %c0_13] : memref<256x128xf32, #tpu.memory_space<vmem>>, vector<256x128xf32>
      %c0_14 = arith.constant 0 : index
      %c0_15 = arith.constant 0 : index
      %16 = vector.load %arg5[%c0_14, %c0_15] : memref<1x128xf32, #tpu.memory_space<vmem>>, vector<1x128xf32>
      %17 = vector.broadcast %16 : vector<1x128xf32> to vector<256x128xf32>
      %18 = arith.addf %15, %17 : vector<256x128xf32>
      %c0_16 = arith.constant 0 : index
      %c0_17 = arith.constant 0 : index
      %19 = vector.load %arg6[%c0_16, %c0_17] : memref<256x128xf32, #tpu.memory_space<vmem>>, vector<256x128xf32>
      tpu.vector_store %arg6[%c0_16, %c0_17], %18 {strides = array<i32>} : memref<256x128xf32, #tpu.memory_space<vmem>>, vector<256x128xf32>,
    } else {
    }
    return
  }
  func.func @transform_0(%arg0: i32, %arg1: i32) -> (i32, i32) {
    %c0_i32 = arith.constant 0 : i32
    return %arg0, %arg1 : i32, i32
  }
  func.func @transform_1(%arg0: i32, %arg1: i32) -> (i32, i32) {
    %c0_i32 = arith.constant 0 : i32
    %c0_i32_0 = arith.constant 0 : i32
    return %arg1, %c0_i32 : i32, i32
  }
  func.func @transform_2(%arg0: i32, %arg1: i32) -> (i32, i32) {
    %c0_i32 = arith.constant 0 : i32
    %c0_i32_0 = arith.constant 0 : i32
    %c0_i32_1 = arith.constant 0 : i32
    return %c0_i32, %c0_i32_0 : i32, i32
  }
  func.func @transform_3(%arg0: i32, %arg1: i32) -> (i32, i32) {
    %c0_i32 = arith.constant 0 : i32
    %c0_i32_0 = arith.constant 0 : i32
    %c0_i32_1 = arith.constant 0 : i32
    return %c0_i32, %c0_i32_0 : i32, i32
  }
  func.func @transform_4(%arg0: i32, %arg1: i32) -> (i32, i32) {
    %c0_i32 = arith.constant 0 : i32
    %c0_i32_0 = arith.constant 0 : i32
    return %arg0, %c0_i32 : i32, i32
  }
}

module attributes {stable_mosaic.version = 11 : i64} {
  func.func @kernel(%arg0: i32, %arg1: i32, %arg2: memref<256x256xbf16, #tpu.memory_space<vmem>>, %arg3: memref<256x16xbf16, #tpu.memory_space<vmem>>, %arg4: memref<16x128xbf16, #tpu.memory_space<vmem>>, %arg5: memref<1x128xf32, #tpu.memory_space<vmem>>, %arg6: memref<256x128xbf16, #tpu.memory_space<vmem>>, %arg7: memref<256x128xf32, #tpu.memory_space<vmem>>) attributes {dimension_semantics = [#tpu.dimension_semantics<parallel>, #tpu.dimension_semantics<arbitrary>], iteration_bounds = array<i64: 2, 2>, scalar_prefetch = 0 : i64, scratch_operands = 1 : i64, tpu.core_type = #tpu.core_type<tc>, window_params = [{transform_indices = @transform_0, window_bounds = array<i64: 256, 256>}, {transform_indices = @transform_1, window_bounds = array<i64: 256, 16>}, {pipeline_mode = #tpu.pipeline_mode<synchronous>, transform_indices = @transform_2, window_bounds = array<i64: 16, 128>}, {pipeline_mode = #tpu.pipeline_mode<synchronous>, transform_indices = @transform_3, window_bounds = array<i64: 1, 128>}, {transform_indices = @transform_4, window_bounds = array<i64: 256, 128>}]} {
    %c0_i32 = arith.constant 0 : i32
    %0 = arith.cmpi eq, %arg1, %c0_i32 : i32
    %1 = arith.extui %0 : i1 to i32
    %c0_i32_0 = arith.constant 0 : i32
    %2 = arith.cmpi ne, %1, %c0_i32_0 : i32
    scf.if %2 {
      %cst_12 = arith.constant 0.000000e+00 : f32
      %15 = vector.broadcast %cst_12 : f32 to vector<256x128xf32>
      %c0_13 = arith.constant 0 : index
      %c0_14 = arith.constant 0 : index
      %16 = vector.load %arg7[%c0_13, %c0_14] : memref<256x128xf32, #tpu.memory_space<vmem>>, vector<256x128xf32>
      tpu.vector_store %arg7[%c0_13, %c0_14], %15 {strides = array<i32>} : memref<256x128xf32, #tpu.memory_space<vmem>>, vector<256x128xf32>,
    } else {
    }
    %c0 = arith.constant 0 : index
    %c0_1 = arith.constant 0 : index
    %3 = vector.load %arg3[%c0, %c0_1] : memref<256x16xbf16, #tpu.memory_space<vmem>>, vector<256x16xbf16>
    %c0_2 = arith.constant 0 : index
    %c0_3 = arith.constant 0 : index
    %4 = vector.load %arg4[%c0_2, %c0_3] : memref<16x128xbf16, #tpu.memory_space<vmem>>, vector<16x128xbf16>
    %cst = arith.constant dense<0.000000e+00> : vector<256x128xf32>
    %5 = tpu.matmul %3, %4, %cst {dimension_numbers = #tpu.dot_dimension_numbers<[1], [0], [0], [1], [0, 0, 1, 1], [], []>} : vector<256x16xbf16>, vector<16x128xbf16>, vector<256x128xf32> -> vector<256x128xf32>
    %6 = arith.truncf %5 : vector<256x128xf32> to vector<256x128xbf16>
    %c0_4 = arith.constant 0 : index
    %c0_5 = arith.constant 0 : index
    %7 = vector.load %arg7[%c0_4, %c0_5] : memref<256x128xf32, #tpu.memory_space<vmem>>, vector<256x128xf32>
    %c0_6 = arith.constant 0 : index
    %c0_7 = arith.constant 0 : index
    %8 = vector.load %arg2[%c0_6, %c0_7] : memref<256x256xbf16, #tpu.memory_space<vmem>>, vector<256x256xbf16>
    %cst_8 = arith.constant dense<0.000000e+00> : vector<256x128xf32>
    %9 = tpu.matmul %8, %6, %cst_8 {dimension_numbers = #tpu.dot_dimension_numbers<[1], [0], [0], [1], [0, 0, 1, 1], [], []>} : vector<256x256xbf16>, vector<256x128xbf16>, vector<256x128xf32> -> vector<256x128xf32>
    %10 = arith.addf %7, %9 : vector<256x128xf32>
    %c0_9 = arith.constant 0 : index
    %c0_10 = arith.constant 0 : index
    %11 = vector.load %arg7[%c0_9, %c0_10] : memref<256x128xf32, #tpu.memory_space<vmem>>, vector<256x128xf32>
    tpu.vector_store %arg7[%c0_9, %c0_10], %10 {strides = array<i32>} : memref<256x128xf32, #tpu.memory_space<vmem>>, vector<256x128xf32>,
    %c1_i32 = arith.constant 1 : i32
    %12 = arith.cmpi eq, %arg1, %c1_i32 : i32
    %13 = arith.extui %12 : i1 to i32
    %c0_i32_11 = arith.constant 0 : i32
    %14 = arith.cmpi ne, %13, %c0_i32_11 : i32
    scf.if %14 {
      %c0_12 = arith.constant 0 : index
      %c0_13 = arith.constant 0 : index
      %15 = vector.load %arg7[%c0_12, %c0_13] : memref<256x128xf32, #tpu.memory_space<vmem>>, vector<256x128xf32>
      %c0_14 = arith.constant 0 : index
      %c0_15 = arith.constant 0 : index
      %16 = vector.load %arg5[%c0_14, %c0_15] : memref<1x128xf32, #tpu.memory_space<vmem>>, vector<1x128xf32>
      %17 = vector.broadcast %16 : vector<1x128xf32> to vector<256x128xf32>
      %18 = arith.addf %15, %17 : vector<256x128xf32>
      %cst_16 = arith.constant 0.000000e+00 : f32
      %19 = vector.broadcast %cst_16 : f32 to vector<256x128xf32>
      %20 = arith.maximumf %18, %19 : vector<256x128xf32>
      %21 = arith.truncf %20 : vector<256x128xf32> to vector<256x128xbf16>
      %c0_17 = arith.constant 0 : index
      %c0_18 = arith.constant 0 : index
      %22 = vector.load %arg6[%c0_17, %c0_18] : memref<256x128xbf16, #tpu.memory_space<vmem>>, vector<256x128xbf16>
      tpu.vector_store %arg6[%c0_17, %c0_18], %21 {strides = array<i32>} : memref<256x128xbf16, #tpu.memory_space<vmem>>, vector<256x128xbf16>,
    } else {
    }
    return
  }
  func.func @transform_0(%arg0: i32, %arg1: i32) -> (i32, i32) {
    %c0_i32 = arith.constant 0 : i32
    return %arg0, %arg1 : i32, i32
  }
  func.func @transform_1(%arg0: i32, %arg1: i32) -> (i32, i32) {
    %c0_i32 = arith.constant 0 : i32
    %c0_i32_0 = arith.constant 0 : i32
    return %arg1, %c0_i32 : i32, i32
  }
  func.func @transform_2(%arg0: i32, %arg1: i32) -> (i32, i32) {
    %c0_i32 = arith.constant 0 : i32
    %c0_i32_0 = arith.constant 0 : i32
    %c0_i32_1 = arith.constant 0 : i32
    return %c0_i32, %c0_i32_0 : i32, i32
  }
  func.func @transform_3(%arg0: i32, %arg1: i32) -> (i32, i32) {
    %c0_i32 = arith.constant 0 : i32
    %c0_i32_0 = arith.constant 0 : i32
    %c0_i32_1 = arith.constant 0 : i32
    return %c0_i32, %c0_i32_0 : i32, i32
  }
  func.func @transform_4(%arg0: i32, %arg1: i32) -> (i32, i32) {
    %c0_i32 = arith.constant 0 : i32
    %c0_i32_0 = arith.constant 0 : i32
    return %arg0, %c0_i32 : i32, i32
  }
}

</mosaic_0001>

<llo_original>
// kernel: gcn_forward.3
$region0: #{gcn_forward.3}
  #allocation0 [shape = 'u32[]', space=smem, size = 0x4, offset = 0x4, fixed_abs, tag = 'smem constant byte address 0x4 - core index']
  #allocation1 [shape = 'u32[72,128]{1,0:T(1,128)}', space=vmem, size = 0x9000, scoped, tag = 'internal scratch']
  #allocation2 [shape = 'f32[256,128]{1,0:T(8,128)}', space=vmem, size = 0x20000, scoped, tag = 'scratch operand']
  %s0 = inlined_call_operand.vmem [shape: bf16[512,512], index: 0, kind: input, shape index: {}]
  %s1 = inlined_call_operand.vmem [shape: bf16[512,128], index: 1, kind: input, shape index: {}]
  %s2 = inlined_call_operand.vmem [shape: bf16[128,128], index: 2, kind: input, shape index: {}]
  %s3 = inlined_call_operand.vmem [shape: f32[1,128], index: 3, kind: input, shape index: {}]
  %s4 = inlined_call_operand.vmem [shape: f32[512,128], index: 4, kind: output, shape index: {}]
  %s5 = sld [smem:[#allocation0]]
  $region95: #{gcn_forward.3} parent=0
    _
  %s7 = ssub.s32 1, %s5
  %s8 = scalar_select 0, %s7, %s5
  $region1: #{gcn_forward.3} parent=0
    #allocation3 [shape = 'u8[262144]{0}', space=vmem, size = 0x40000, scoped, tag = 'input window, operand 0']
    loop: start=0, step=1, limit=6
    $region2: #{gcn_forward.3} parent=1 // loop_pre_header
      _
    $region3: #{gcn_forward.3} parent=1 // loop_header
      %s10 = sphi 0, %s14
      %p11 = scmp.ge.s32.totalorder %s10, 6
      %s17 = sphi 0, %s29
      %s18 = sphi 0, %s25
      %s19 = sphi 0, %s17
      %s20 = sphi 0, %s18
      %s21 = sphi 0, %s19
      %s22 = sphi 0, %s20
      %s34 = sphi 0, %s36
      %s37 = sphi 0, %s34
      %s38 = sphi 0, %s37
      %s54 = sphi 0, %s38
      %s60 = sphi 0, %s62
      %s63 = sphi 0, %s60
      %s64 = sphi 0, %s63
      %s80 = sphi 0, %s64
      %s84 = sphi 0, %s84
      %s86 = sphi 0, %s84
      %s87 = sphi 0, %s86
      %s101 = sphi 0, %s87
      %s105 = sphi 0, %s105
      %s107 = sphi 0, %s105
      %s108 = sphi 0, %s107
      %s122 = sphi 0, %s108
      %s128 = sphi 0, %s130
      %s131 = sphi 0, %s128
      %s132 = sphi 0, %s131
      %s148 = sphi 0, %s132
    $region4: #{gcn_forward.3} parent=1 // loop_header_branch
      %13 = sbr.rel (%p11) target = $region8
    $region5: #{gcn_forward.3} parent=1 // loop_body
      %s15 = ssub.s32 %s10, 1
      %s16 = ssub.s32 %s10, 2
      %s23 = sadd.s32 1, %s18
      %p24 = scmp.ge.s32.totalorder %s23, 2
      %s25 = scalar_select %p24, 0, %s23
      %s26 = sadd.s32 1, %s17
      %s27 = scalar_select %p24, %s26, %s17
      %p28 = scmp.ge.s32.totalorder %s27, 2
      %s29 = scalar_select %p28, 0, %s27
      %s30 = ssub.s32 %s17, %s29
      %s31 = ssub.s32 %s18, %s25
      %s32 = sor.u32 %s30, %s31
      %p33 = scmp.eq.s32.totalorder %s32, 0
      %s35 = sadd.s32 %s34, 1
      %s36 = scalar_select %p33, %s34, %s35
      %p39 = pneg %p33
      %p40 = scmp.eq.s32.totalorder %s10, 3
      %p41 = por %p39, %p40
      %p42 = scmp.ne.s32.totalorder %s34, %s37
      %p43 = scmp.eq.s32.totalorder %s10, 0
      %p44 = por %p42, %p43
      %p45 = scmp.ne.s32.totalorder %s34, %s37
      %p46 = scmp.eq.s32.totalorder %s15, 3
      %p47 = por %p45, %p46
      %p48 = scmp.ne.s32.totalorder %s37, %s38
      %p49 = scmp.eq.s32.totalorder %s15, 0
      %p50 = por %p48, %p49
      %p51 = scmp.ne.s32.totalorder %s37, %s38
      %p52 = scmp.eq.s32.totalorder %s16, 3
      %p53 = por %p51, %p52
      %p55 = scmp.ne.s32.totalorder %s38, %s54
      %p56 = scmp.eq.s32.totalorder %s16, 0
      %p57 = por %p55, %p56
      %s58 = ssub.s32 %s18, %s25
      %p59 = scmp.eq.s32.totalorder %s58, 0
      %s61 = sadd.s32 %s60, 1
      %s62 = scalar_select %p59, %s60, %s61
      %p65 = pneg %p59
      %p66 = scmp.eq.s32.totalorder %s10, 3
      %p67 = por %p65, %p66
      %p68 = scmp.ne.s32.totalorder %s60, %s63
      %p69 = scmp.eq.s32.totalorder %s10, 0
      %p70 = por %p68, %p69
      %p71 = scmp.ne.s32.totalorder %s60, %s63
      %p72 = scmp.eq.s32.totalorder %s15, 3
      %p73 = por %p71, %p72
      %p74 = scmp.ne.s32.totalorder %s63, %s64
      %p75 = scmp.eq.s32.totalorder %s15, 0
      %p76 = por %p74, %p75
      %p77 = scmp.ne.s32.totalorder %s63, %s64
      %p78 = scmp.eq.s32.totalorder %s16, 3
      %p79 = por %p77, %p78
      %p81 = scmp.ne.s32.totalorder %s64, %s80
      %p82 = scmp.eq.s32.totalorder %s16, 0
      %p83 = por %p81, %p82
      %s85 = sadd.s32 %s84, 1
      %p88 = scmp.eq.s32.totalorder %s10, 3
      %p89 = scmp.ne.s32.totalorder %s84, %s86
      %p90 = scmp.eq.s32.totalorder %s10, 0
      %p91 = por %p89, %p90
      %p92 = scmp.ne.s32.totalorder %s84, %s86
      %p93 = scmp.eq.s32.totalorder %s15, 3
      %p94 = por %p92, %p93
      %p95 = scmp.ne.s32.totalorder %s86, %s87
      %p96 = scmp.eq.s32.totalorder %s15, 0
      %p97 = por %p95, %p96
      %p98 = scmp.ne.s32.totalorder %s86, %s87
      %p99 = scmp.eq.s32.totalorder %s16, 3
      %p100 = por %p98, %p99
      %p102 = scmp.ne.s32.totalorder %s87, %s101
      %p103 = scmp.eq.s32.totalorder %s16, 0
      %p104 = por %p102, %p103
      %s106 = sadd.s32 %s105, 1
      %p109 = scmp.eq.s32.totalorder %s10, 3
      %p110 = scmp.ne.s32.totalorder %s105, %s107
      %p111 = scmp.eq.s32.totalorder %s10, 0
      %p112 = por %p110, %p111
      %p113 = scmp.ne.s32.totalorder %s105, %s107
      %p114 = scmp.eq.s32.totalorder %s15, 3
      %p115 = por %p113, %p114
      %p116 = scmp.ne.s32.totalorder %s107, %s108
      %p117 = scmp.eq.s32.totalorder %s15, 0
      %p118 = por %p116, %p117
      %p119 = scmp.ne.s32.totalorder %s107, %s108
      %p120 = scmp.eq.s32.totalorder %s16, 3
      %p121 = por %p119, %p120
      %p123 = scmp.ne.s32.totalorder %s108, %s122
      %p124 = scmp.eq.s32.totalorder %s16, 0
      %p125 = por %p123, %p124
      %s126 = ssub.s32 %s17, %s29
      %p127 = scmp.eq.s32.totalorder %s126, 0
      %s129 = sadd.s32 %s128, 1
      %s130 = scalar_select %p127, %s128, %s129
      %p133 = pneg %p127
      %p134 = scmp.eq.s32.totalorder %s10, 3
      %p135 = por %p133, %p134
      %p136 = scmp.ne.s32.totalorder %s128, %s131
      %p137 = scmp.eq.s32.totalorder %s10, 0
      %p138 = por %p136, %p137
      %p139 = scmp.ne.s32.totalorder %s128, %s131
      %p140 = scmp.eq.s32.totalorder %s15, 3
      %p141 = por %p139, %p140
      %p142 = scmp.ne.s32.totalorder %s131, %s132
      %p143 = scmp.eq.s32.totalorder %s15, 0
      %p144 = por %p142, %p143
      %p145 = scmp.ne.s32.totalorder %s131, %s132
      %p146 = scmp.eq.s32.totalorder %s16, 3
      %p147 = por %p145, %p146
      %p149 = scmp.ne.s32.totalorder %s132, %s148
      %p150 = scmp.eq.s32.totalorder %s16, 0
      %p151 = por %p149, %p150
      %p152 = scmp.le.s32.totalorder 1, %s10
      %p153 = scmp.lt.s32.totalorder %s10, 5
      %p154 = pnand %p152, %p153
      %p155 = pneg %p154
      // Predicated region
      $region9: #{gcn_forward.3} parent=5 // pred_check
        _
      $region10: #{gcn_forward.3} parent=5 // pred_check_branch
        %157 = sbr.rel (%p154) target = $region12
      $region11: #{gcn_forward.3} parent=5 // pred_region
        %s158 = ssub.s32 %s10, 1
        // Predicated region
        $region13: #{gcn_forward.3} parent=11 // pred_check
          %p159 = pneg %p97
        $region14: #{gcn_forward.3} parent=11 // pred_check_branch
          %161 = sbr.rel (%p159) target = $region16
        $region15: #{gcn_forward.3} parent=11 // pred_region
          _
        $region16: #{gcn_forward.3} parent=11 // pred_fallthru
          _
        // Predicated region
        $region17: #{gcn_forward.3} parent=11 // pred_check
          %p162 = pneg %p118
        $region18: #{gcn_forward.3} parent=11 // pred_check_branch
          %164 = sbr.rel (%p162) target = $region20
        $region19: #{gcn_forward.3} parent=11 // pred_region
          _
        $region20: #{gcn_forward.3} parent=11 // pred_fallthru
          _
      $region12: #{gcn_forward.3} parent=5 // pred_fallthru
        _
      %p165 = scmp.lt.s32.totalorder %s10, 4
      // Predicated region
      $region21: #{gcn_forward.3} parent=5 // pred_check
        %p166 = pneg %p165
      $region22: #{gcn_forward.3} parent=5 // pred_check_branch
        %168 = sbr.rel (%p166) target = $region24
      $region23: #{gcn_forward.3} parent=5 // pred_region
        // Predicated region
        $region25: #{gcn_forward.3} parent=23 // pred_check
          %p169 = pneg %p44
        $region26: #{gcn_forward.3} parent=23 // pred_check_branch
          %171 = sbr.rel (%p169) target = $region28
        $region27: #{gcn_forward.3} parent=23 // pred_region
          %s172 = sand.u32 %s34, 1
          %s173 = sand.u32 %s34, 1
          %s174 = smul.addr %s173, 256
          %s175 = scalar_lea.vmem [#allocation3], %s174
          %s176 = smul.u32 32, %s17
          %s177 = smul.u32 2, %s18
          %s178 = smul.addr %s176, 4
          %s179 = sadd.s32 %s177, %s178
          %s180 = smul.addr %s179, 4
          %s181 = scalar_lea.vmem %s0, %s180
          // Predicated region
          $region29: #{gcn_forward.3} parent=27 // pred_check
            _
          $region30: #{gcn_forward.3} parent=27 // pred_check_branch
            %183 = sbr.rel (0) target = $region32
          $region31: #{gcn_forward.3} parent=27 // pred_region
            // Predicated region
            $region33: #{gcn_forward.3} parent=31 // pred_check
              _
            $region34: #{gcn_forward.3} parent=31 // pred_check_branch
              %185 = sbr.rel (0) target = $region36
            $region35: #{gcn_forward.3} parent=31 // pred_region
              // Predicated region
              $region48: #{gcn_forward.3} parent=35 // pred_check
                _
              $region49: #{gcn_forward.3} parent=35 // pred_check_branch
                %263 = sbr.rel (0) target = $region51
              $region50: #{gcn_forward.3} parent=35 // pred_region
                loop: start=0, step=1, limit=1
                $region52: #{gcn_forward.3} parent=50 // loop_pre_header
                  _
                $region53: #{gcn_forward.3} parent=50 // loop_header
                  %s265 = sphi 0, %s269
                  %p266 = scmp.ge.s32.totalorder %s265, 1
                  %s270 = sphi %s181, %s181
                  %s271 = sphi %s175, %s175
                $region54: #{gcn_forward.3} parent=50 // loop_header_branch
                  %268 = sbr.rel (%p266) target = $region58
                $region55: #{gcn_forward.3} parent=50 // loop_body
                  %v272 = vld [vmem:[%s270] sm:$0xff]
                  %273 = vst [vmem:[%s271] sm:$0xff] %v272
                  %v274 = vld [vmem:[%s270 + $0x10] sm:$0xff]
                  %275 = vst [vmem:[%s271 + $0x8] sm:$0xff] %v274
                  %v276 = vld [vmem:[%s270 + $0x20] sm:$0xff]
                  %277 = vst [vmem:[%s271 + $0x10] sm:$0xff] %v276
                  %v278 = vld [vmem:[%s270 + $0x30] sm:$0xff]
                  %279 = vst [vmem:[%s271 + $0x18] sm:$0xff] %v278
                  %v280 = vld [vmem:[%s270 + $0x40] sm:$0xff]
                  %281 = vst [vmem:[%s271 + $0x20] sm:$0xff] %v280
                  %v282 = vld [vmem:[%s270 + $0x50] sm:$0xff]
                  %283 = vst [vmem:[%s271 + $0x28] sm:$0xff] %v282
                  %v284 = vld [vmem:[%s270 + $0x60] sm:$0xff]
                  %285 = vst [vmem:[%s271 + $0x30] sm:$0xff] %v284
                  %v286 = vld [vmem:[%s270 + $0x70] sm:$0xff]
                  %287 = vst [vmem:[%s271 + $0x38] sm:$0xff] %v286
                  %v288 = vld [vmem:[%s270 + $0x80] sm:$0xff]
                  %289 = vst [vmem:[%s271 + $0x40] sm:$0xff] %v288
                  %v290 = vld [vmem:[%s270 + $0x90] sm:$0xff]
                  %291 = vst [vmem:[%s271 + $0x48] sm:$0xff] %v290
                  %v292 = vld [vmem:[%s270 + $0xa0] sm:$0xff]
                  %293 = vst [vmem:[%s271 + $0x50] sm:$0xff] %v292
                  %v294 = vld [vmem:[%s270 + $0xb0] sm:$0xff]
                  %295 = vst [vmem:[%s271 + $0x58] sm:$0xff] %v294
                  %v296 = vld [vmem:[%s270 + $0xc0] sm:$0xff]
                  %297 = vst [vmem:[%s271 + $0x60] sm:$0xff] %v296
                  %v298 = vld [vmem:[%s270 + $0xd0] sm:$0xff]
                  %299 = vst [vmem:[%s271 + $0x68] sm:$0xff] %v298
                  %v300 = vld [vmem:[%s270 + $0xe0] sm:$0xff]
                  %301 = vst [vmem:[%s271 + $0x70] sm:$0xff] %v300
                  %v302 = vld [vmem:[%s270 + $0xf0] sm:$0xff]
                  %303 = vst [vmem:[%s271 + $0x78] sm:$0xff] %v302
                  %v304 = vld [vmem:[%s270 + $0x100] sm:$0xff]
                  %305 = vst [vmem:[%s271 + $0x80] sm:$0xff] %v304
                  %v306 = vld [vmem:[%s270 + $0x110] sm:$0xff]
                  %307 = vst [vmem:[%s271 + $0x88] sm:$0xff] %v306
                  %v308 = vld [vmem:[%s270 + $0x120] sm:$0xff]
                  %309 = vst [vmem:[%s271 + $0x90] sm:$0xff] %v308
                  %v310 = vld [vmem:[%s270 + $0x130] sm:$0xff]
                  %311 = vst [vmem:[%s271 + $0x98] sm:$0xff] %v310
                  %v312 = vld [vmem:[%s270 + $0x140] sm:$0xff]
                  %313 = vst [vmem:[%s271 + $0xa0] sm:$0xff] %v312
                  %v314 = vld [vmem:[%s270 + $0x150] sm:$0xff]
                  %315 = vst [vmem:[%s271 + $0xa8] sm:$0xff] %v314
                  %v316 = vld [vmem:[%s270 + $0x160] sm:$0xff]
                  %317 = vst [vmem:[%s271 + $0xb0] sm:$0xff] %v316
                  %v318 = vld [vmem:[%s270 + $0x170] sm:$0xff]
                  %319 = vst [vmem:[%s271 + $0xb8] sm:$0xff] %v318
                  %v320 = vld [vmem:[%s270 + $0x180] sm:$0xff]
                  %321 = vst [vmem:[%s271 + $0xc0] sm:$0xff] %v320
                  %v322 = vld [vmem:[%s270 + $0x190] sm:$0xff]
                  %323 = vst [vmem:[%s271 + $0xc8] sm:$0xff] %v322
                  %v324 = vld [vmem:[%s270 + $0x1a0] sm:$0xff]
                  %325 = vst [vmem:[%s271 + $0xd0] sm:$0xff] %v324
                  %v326 = vld [vmem:[%s270 + $0x1b0] sm:$0xff]
                  %327 = vst [vmem:[%s271 + $0xd8] sm:$0xff] %v326
                  %v328 = vld [vmem:[%s270 + $0x1c0] sm:$0xff]
                  %329 = vst [vmem:[%s271 + $0xe0] sm:$0xff] %v328
                  %v330 = vld [vmem:[%s270 + $0x1d0] sm:$0xff]
                  %331 = vst [vmem:[%s271 + $0xe8] sm:$0xff] %v330
                  %v332 = vld [vmem:[%s270 + $0x1e0] sm:$0xff]
                  %333 = vst [vmem:[%s271 + $0xf0] sm:$0xff] %v332
                  %v334 = vld [vmem:[%s270 + $0x1f0] sm:$0xff]
                  %335 = vst [vmem:[%s271 + $0xf8] sm:$0xff] %v334
                $region56: #{gcn_forward.3} parent=50 // loop_footer
                  %s269 = sadd.s32 1, %s265
                $region57: #{gcn_forward.3} parent=50 // loop_footer_branch
                  %264 = sbr.rel target = $region53
                $region58: #{gcn_forward.3} parent=50 // loop_exit
                  _
              $region51: #{gcn_forward.3} parent=35 // pred_fallthru
                _
              // Predicated region
              $region59: #{gcn_forward.3} parent=35 // pred_check
                _
              $region60: #{gcn_forward.3} parent=35 // pred_check_branch
                %337 = sbr.rel target = $region62
              $region61: #{gcn_forward.3} parent=35 // pred_region
                _
              $region62: #{gcn_forward.3} parent=35 // pred_fallthru
                _
            $region36: #{gcn_forward.3} parent=31 // pred_fallthru
              _
            // Predicated region
            $region37: #{gcn_forward.3} parent=31 // pred_check
              _
            $region38: #{gcn_forward.3} parent=31 // pred_check_branch
              %187 = sbr.rel target = $region40
            $region39: #{gcn_forward.3} parent=31 // pred_region
              %s189 = ssub.s32 256, 1
              loop: start=0, step=1, limit=1
              $region41: #{gcn_forward.3} parent=39 // loop_pre_header
                _
              $region42: #{gcn_forward.3} parent=39 // loop_header
                %s191 = sphi 0, %s195
                %p192 = scmp.ge.s32.totalorder %s191, 1
                %s196 = sphi %s181, %s181
                %s197 = sphi %s175, %s175
              $region43: #{gcn_forward.3} parent=39 // loop_header_branch
                %194 = sbr.rel (%p192) target = $region47
              $region44: #{gcn_forward.3} parent=39 // loop_body
                %v198 = vld [vmem:[%s196] sm:%s189]
                %199 = vst [vmem:[%s197] sm:%s189] %v198
                %v200 = vld [vmem:[%s196 + $0x10] sm:%s189]
                %201 = vst [vmem:[%s197 + $0x8] sm:%s189] %v200
                %v202 = vld [vmem:[%s196 + $0x20] sm:%s189]
                %203 = vst [vmem:[%s197 + $0x10] sm:%s189] %v202
                %v204 = vld [vmem:[%s196 + $0x30] sm:%s189]
                %205 = vst [vmem:[%s197 + $0x18] sm:%s189] %v204
                %v206 = vld [vmem:[%s196 + $0x40] sm:%s189]
                %207 = vst [vmem:[%s197 + $0x20] sm:%s189] %v206
                %v208 = vld [vmem:[%s196 + $0x50] sm:%s189]
                %209 = vst [vmem:[%s197 + $0x28] sm:%s189] %v208
                %v210 = vld [vmem:[%s196 + $0x60] sm:%s189]
                %211 = vst [vmem:[%s197 + $0x30] sm:%s189] %v210
                %v212 = vld [vmem:[%s196 + $0x70] sm:%s189]
                %213 = vst [vmem:[%s197 + $0x38] sm:%s189] %v212
                %v214 = vld [vmem:[%s196 + $0x80] sm:%s189]
                %215 = vst [vmem:[%s197 + $0x40] sm:%s189] %v214
                %v216 = vld [vmem:[%s196 + $0x90] sm:%s189]
                %217 = vst [vmem:[%s197 + $0x48] sm:%s189] %v216
                %v218 = vld [vmem:[%s196 + $0xa0] sm:%s189]
                %219 = vst [vmem:[%s197 + $0x50] sm:%s189] %v218
                %v220 = vld [vmem:[%s196 + $0xb0] sm:%s189]
                %221 = vst [vmem:[%s197 + $0x58] sm:%s189] %v220
                %v222 = vld [vmem:[%s196 + $0xc0] sm:%s189]
                %223 = vst [vmem:[%s197 + $0x60] sm:%s189] %v222
                %v224 = vld [vmem:[%s196 + $0xd0] sm:%s189]
                %225 = vst [vmem:[%s197 + $0x68] sm:%s189] %v224
                %v226 = vld [vmem:[%s196 + $0xe0] sm:%s189]
                %227 = vst [vmem:[%s197 + $0x70] sm:%s189] %v226
                %v228 = vld [vmem:[%s196 + $0xf0] sm:%s189]
                %229 = vst [vmem:[%s197 + $0x78] sm:%s189] %v228
                %v230 = vld [vmem:[%s196 + $0x100] sm:%s189]
                %231 = vst [vmem:[%s197 + $0x80] sm:%s189] %v230
                %v232 = vld [vmem:[%s196 + $0x110] sm:%s189]
                %233 = vst [vmem:[%s197 + $0x88] sm:%s189] %v232
                %v234 = vld [vmem:[%s196 + $0x120] sm:%s189]
                %235 = vst [vmem:[%s197 + $0x90] sm:%s189] %v234
                %v236 = vld [vmem:[%s196 + $0x130] sm:%s189]
                %237 = vst [vmem:[%s197 + $0x98] sm:%s189] %v236
                %v238 = vld [vmem:[%s196 + $0x140] sm:%s189]
                %239 = vst [vmem:[%s197 + $0xa0] sm:%s189] %v238
                %v240 = vld [vmem:[%s196 + $0x150] sm:%s189]
                %241 = vst [vmem:[%s197 + $0xa8] sm:%s189] %v240
                %v242 = vld [vmem:[%s196 + $0x160] sm:%s189]
                %243 = vst [vmem:[%s197 + $0xb0] sm:%s189] %v242
                %v244 = vld [vmem:[%s196 + $0x170] sm:%s189]
                %245 = vst [vmem:[%s197 + $0xb8] sm:%s189] %v244
                %v246 = vld [vmem:[%s196 + $0x180] sm:%s189]
                %247 = vst [vmem:[%s197 + $0xc0] sm:%s189] %v246
                %v248 = vld [vmem:[%s196 + $0x190] sm:%s189]
                %249 = vst [vmem:[%s197 + $0xc8] sm:%s189] %v248
                %v250 = vld [vmem:[%s196 + $0x1a0] sm:%s189]
                %251 = vst [vmem:[%s197 + $0xd0] sm:%s189] %v250
                %v252 = vld [vmem:[%s196 + $0x1b0] sm:%s189]
                %253 = vst [vmem:[%s197 + $0xd8] sm:%s189] %v252
                %v254 = vld [vmem:[%s196 + $0x1c0] sm:%s189]
                %255 = vst [vmem:[%s197 + $0xe0] sm:%s189] %v254
                %v256 = vld [vmem:[%s196 + $0x1d0] sm:%s189]
                %257 = vst [vmem:[%s197 + $0xe8] sm:%s189] %v256
                %v258 = vld [vmem:[%s196 + $0x1e0] sm:%s189]
                %259 = vst [vmem:[%s197 + $0xf0] sm:%s189] %v258
                %v260 = vld [vmem:[%s196 + $0x1f0] sm:%s189]
                %261 = vst [vmem:[%s197 + $0xf8] sm:%s189] %v260
              $region45: #{gcn_forward.3} parent=39 // loop_footer
                %s195 = sadd.s32 1, %s191
              $region46: #{gcn_forward.3} parent=39 // loop_footer_branch
                %190 = sbr.rel target = $region42
              $region47: #{gcn_forward.3} parent=39 // loop_exit
                _
            $region40: #{gcn_forward.3} parent=31 // pred_fallthru
              _
          $region32: #{gcn_forward.3} parent=27 // pred_fallthru
            _
          %338 = vnop
        $region28: #{gcn_forward.3} parent=23 // pred_fallthru
          _
        // Predicated region
        $region63: #{gcn_forward.3} parent=23 // pred_check
          %p339 = pneg %p70
        $region64: #{gcn_forward.3} parent=23 // pred_check_branch
          %341 = sbr.rel (%p339) target = $region66
        $region65: #{gcn_forward.3} parent=23 // pred_region
          %s342 = smul.u32 32, %s18
          %p343 = scmp.lt.s32.totalorder %s342, 63
          %s344 = scalar_select %p343, %s342, 63
          %s345 = smul.addr %s344, 4
          %s346 = scalar_lea.vmem %s1, %s345
          %s347 = smul.u32 32, %s18
        $region66: #{gcn_forward.3} parent=23 // pred_fallthru
          _
      $region24: #{gcn_forward.3} parent=5 // pred_fallthru
        _
      %p348 = scmp.le.s32.totalorder 1, %s10
      %p349 = scmp.lt.s32.totalorder %s10, 5
      %p350 = pnand %p348, %p349
      %p351 = pneg %p350
      // Predicated region
      $region67: #{gcn_forward.3} parent=5 // pred_check
        _
      $region68: #{gcn_forward.3} parent=5 // pred_check_branch
        %353 = sbr.rel (%p350) target = $region70
      $region69: #{gcn_forward.3} parent=5 // pred_region
        %s354 = ssub.s32 %s10, 1
        %s355 = sand.u32 %s37, 1
        %s356 = sand.u32 %s37, 1
        %s357 = smul.addr %s356, 256
        %s358 = scalar_lea.vmem [#allocation3], %s357
        // Predicated region
        $region71: #{gcn_forward.3} parent=69 // pred_check
          %p359 = pneg %p50
        $region72: #{gcn_forward.3} parent=69 // pred_check_branch
          %361 = sbr.rel (%p359) target = $region74
        $region73: #{gcn_forward.3} parent=69 // pred_region
          _
        $region74: #{gcn_forward.3} parent=69 // pred_fallthru
          _
        %s362 = sand.u32 %s37, 1
        %s363 = sand.u32 %s37, 1
        %s364 = smul.addr %s363, 256
        %s365 = scalar_lea.vmem [#allocation3], %s364
        %p366 = pneg %p50
        %p367 = pneg %p47
        %s368 = smul.u32 32, %s20
        %p369 = scmp.lt.s32.totalorder %s368, 63
        %s370 = scalar_select %p369, %s368, 63
        %s371 = smul.addr %s370, 4
        %s372 = scalar_lea.vmem %s1, %s371
        %p373 = pneg %p76
        %p374 = pneg %p73
        %p375 = pneg %p97
        %p376 = pneg %p94
        %p377 = pneg %p118
        %p378 = pneg %p115
        %p379 = pneg %p144
        %p380 = pneg %p141
        %s381 = smul.u32 32, %s19
        %p382 = scmp.lt.s32.totalorder %s381, 63
        %s383 = scalar_select %p382, %s381, 63
        %s384 = smul.addr %s383, 8
        %s385 = scalar_lea.vmem %s4, %s384
        %s386 = smul.u32 32, %s19
        %s387 = smul.u32 2, %s20
        %s388 = smul.u32 32, %s20
        %p389 = scmp.lt.s32.totalorder %s388, 63
        %s390 = scalar_select %p389, %s388, 63
        %s391 = smul.addr %s390, 4
        %s392 = scalar_lea.vmem %s1, %s391
        %s393 = smul.u32 32, %s20
        %s394 = smul.u32 32, %s19
        %p395 = scmp.lt.s32.totalorder %s394, 63
        %s396 = scalar_select %p395, %s394, 63
        %s397 = smul.addr %s396, 8
        %s398 = scalar_lea.vmem %s4, %s397
        %s399 = smul.u32 32, %s19
        %p400 = scmp.eq.s32.totalorder %s20, 0
        // Predicated region
        $region75: #{gcn_forward.3} parent=69 // pred_check
          %p401 = pneg %p400
        $region76: #{gcn_forward.3} parent=69 // pred_check_branch
          %403 = sbr.rel (%p401) target = $region78
        $region77: #{gcn_forward.3} parent=69 // pred_region
          %404 = vst [vmem:[#allocation2] sm:$0xff] 0.0
          %405 = vst [vmem:[#allocation2 + $0x8] sm:$0xff] 0.0
          %406 = vst [vmem:[#allocation2 + $0x10] sm:$0xff] 0.0
          %407 = vst [vmem:[#allocation2 + $0x18] sm:$0xff] 0.0
          %408 = vst [vmem:[#allocation2 + $0x20] sm:$0xff] 0.0
          %409 = vst [vmem:[#allocation2 + $0x28] sm:$0xff] 0.0
          %410 = vst [vmem:[#allocation2 + $0x30] sm:$0xff] 0.0
          %411 = vst [vmem:[#allocation2 + $0x38] sm:$0xff] 0.0
          %412 = vst [vmem:[#allocation2 + $0x40] sm:$0xff] 0.0
          %413 = vst [vmem:[#allocation2 + $0x48] sm:$0xff] 0.0
          %414 = vst [vmem:[#allocation2 + $0x50] sm:$0xff] 0.0
          %415 = vst [vmem:[#allocation2 + $0x58] sm:$0xff] 0.0
          %416 = vst [vmem:[#allocation2 + $0x60] sm:$0xff] 0.0
          %417 = vst [vmem:[#allocation2 + $0x68] sm:$0xff] 0.0
          %418 = vst [vmem:[#allocation2 + $0x70] sm:$0xff] 0.0
          %419 = vst [vmem:[#allocation2 + $0x78] sm:$0xff] 0.0
          %420 = vst [vmem:[#allocation2 + $0x80] sm:$0xff] 0.0
          %421 = vst [vmem:[#allocation2 + $0x88] sm:$0xff] 0.0
          %422 = vst [vmem:[#allocation2 + $0x90] sm:$0xff] 0.0
          %423 = vst [vmem:[#allocation2 + $0x98] sm:$0xff] 0.0
          %424 = vst [vmem:[#allocation2 + $0xa0] sm:$0xff] 0.0
          %425 = vst [vmem:[#allocation2 + $0xa8] sm:$0xff] 0.0
          %426 = vst [vmem:[#allocation2 + $0xb0] sm:$0xff] 0.0
          %427 = vst [vmem:[#allocation2 + $0xb8] sm:$0xff] 0.0
          %428 = vst [vmem:[#allocation2 + $0xc0] sm:$0xff] 0.0
          %429 = vst [vmem:[#allocation2 + $0xc8] sm:$0xff] 0.0
          %430 = vst [vmem:[#allocation2 + $0xd0] sm:$0xff] 0.0
          %431 = vst [vmem:[#allocation2 + $0xd8] sm:$0xff] 0.0
          %432 = vst [vmem:[#allocation2 + $0xe0] sm:$0xff] 0.0
          %433 = vst [vmem:[#allocation2 + $0xe8] sm:$0xff] 0.0
          %434 = vst [vmem:[#allocation2 + $0xf0] sm:$0xff] 0.0
          %435 = vst [vmem:[#allocation2 + $0xf8] sm:$0xff] 0.0
        $region78: #{gcn_forward.3} parent=69 // pred_fallthru
          _
        %v436 = vld [vmem:[%s392] sm:$0xf]
        %v437 = vld [vmem:[%s392 + $0x4] sm:$0xf]
        %v438 = vld [vmem:[%s392 + $0x8] sm:$0xf]
        %v439 = vld [vmem:[%s392 + $0xc] sm:$0xf]
        %v440 = vld [vmem:[%s392 + $0x10] sm:$0xf]
        %v441 = vld [vmem:[%s392 + $0x14] sm:$0xf]
        %v442 = vld [vmem:[%s392 + $0x18] sm:$0xf]
        %v443 = vld [vmem:[%s392 + $0x1c] sm:$0xf]
        %v444 = vld [vmem:[%s392 + $0x20] sm:$0xf]
        %v445 = vld [vmem:[%s392 + $0x24] sm:$0xf]
        %v446 = vld [vmem:[%s392 + $0x28] sm:$0xf]
        %v447 = vld [vmem:[%s392 + $0x2c] sm:$0xf]
        %v448 = vld [vmem:[%s392 + $0x30] sm:$0xf]
        %v449 = vld [vmem:[%s392 + $0x34] sm:$0xf]
        %v450 = vld [vmem:[%s392 + $0x38] sm:$0xf]
        %v451 = vld [vmem:[%s392 + $0x3c] sm:$0xf]
        %v452 = vld [vmem:[%s392 + $0x40] sm:$0xf]
        %v453 = vld [vmem:[%s392 + $0x44] sm:$0xf]
        %v454 = vld [vmem:[%s392 + $0x48] sm:$0xf]
        %v455 = vld [vmem:[%s392 + $0x4c] sm:$0xf]
        %v456 = vld [vmem:[%s392 + $0x50] sm:$0xf]
        %v457 = vld [vmem:[%s392 + $0x54] sm:$0xf]
        %v458 = vld [vmem:[%s392 + $0x58] sm:$0xf]
        %v459 = vld [vmem:[%s392 + $0x5c] sm:$0xf]
        %v460 = vld [vmem:[%s392 + $0x60] sm:$0xf]
        %v461 = vld [vmem:[%s392 + $0x64] sm:$0xf]
        %v462 = vld [vmem:[%s392 + $0x68] sm:$0xf]
        %v463 = vld [vmem:[%s392 + $0x6c] sm:$0xf]
        %v464 = vld [vmem:[%s392 + $0x70] sm:$0xf]
        %v465 = vld [vmem:[%s392 + $0x74] sm:$0xf]
        %v466 = vld [vmem:[%s392 + $0x78] sm:$0xf]
        %v467 = vld [vmem:[%s392 + $0x7c] sm:$0xf]
        %v468 = vld [vmem:[%s2] sm:$0xf]
        %v469 = vld [vmem:[%s2 + $0x4] sm:$0xf]
        %v470 = vld [vmem:[%s2 + $0x8] sm:$0xf]
        %v471 = vld [vmem:[%s2 + $0xc] sm:$0xf]
        %v472 = vld [vmem:[%s2 + $0x10] sm:$0xf]
        %v473 = vld [vmem:[%s2 + $0x14] sm:$0xf]
        %v474 = vld [vmem:[%s2 + $0x18] sm:$0xf]
        %v475 = vld [vmem:[%s2 + $0x1c] sm:$0xf]
        %v476 = vld [vmem:[%s2 + $0x20] sm:$0xf]
        %v477 = vld [vmem:[%s2 + $0x24] sm:$0xf]
        %v478 = vld [vmem:[%s2 + $0x28] sm:$0xf]
        %v479 = vld [vmem:[%s2 + $0x2c] sm:$0xf]
        %v480 = vld [vmem:[%s2 + $0x30] sm:$0xf]
        %v481 = vld [vmem:[%s2 + $0x34] sm:$0xf]
        %v482 = vld [vmem:[%s2 + $0x38] sm:$0xf]
        %v483 = vld [vmem:[%s2 + $0x3c] sm:$0xf]
        %v516 = vunpack.c.l.b16 %v436
        %v517 = vunpack.c.l.b16 %v437
        %v518 = vunpack.c.l.b16 %v438
        %v519 = vunpack.c.l.b16 %v439
        %v520 = vunpack.c.l.b16 %v440
        %v521 = vunpack.c.l.b16 %v441
        %v522 = vunpack.c.l.b16 %v442
        %v523 = vunpack.c.l.b16 %v443
        %v524 = vunpack.c.l.b16 %v444
        %v525 = vunpack.c.l.b16 %v445
        %v526 = vunpack.c.l.b16 %v446
        %v527 = vunpack.c.l.b16 %v447
        %v528 = vunpack.c.l.b16 %v448
        %v529 = vunpack.c.l.b16 %v449
        %v530 = vunpack.c.l.b16 %v450
        %v531 = vunpack.c.l.b16 %v451
        %v532 = vunpack.c.l.b16 %v452
        %v533 = vunpack.c.l.b16 %v453
        %v534 = vunpack.c.l.b16 %v454
        %v535 = vunpack.c.l.b16 %v455
        %v536 = vunpack.c.l.b16 %v456
        %v537 = vunpack.c.l.b16 %v457
        %v538 = vunpack.c.l.b16 %v458
        %v539 = vunpack.c.l.b16 %v459
        %v540 = vunpack.c.l.b16 %v460
        %v541 = vunpack.c.l.b16 %v461
        %v542 = vunpack.c.l.b16 %v462
        %v543 = vunpack.c.l.b16 %v463
        %v544 = vunpack.c.l.b16 %v464
        %v545 = vunpack.c.l.b16 %v465
        %v546 = vunpack.c.l.b16 %v466
        %v547 = vunpack.c.l.b16 %v467
        %v548 = vpack.c.b16 %v517, %v516
        %v549 = vpack.c.b16 %v519, %v518
        %v550 = vpack.c.b16 %v521, %v520
        %v551 = vpack.c.b16 %v523, %v522
        %v552 = vpack.c.b16 %v525, %v524
        %v553 = vpack.c.b16 %v527, %v526
        %v554 = vpack.c.b16 %v529, %v528
        %v555 = vpack.c.b16 %v531, %v530
        %v556 = vpack.c.b16 %v533, %v532
        %v557 = vpack.c.b16 %v535, %v534
        %v558 = vpack.c.b16 %v537, %v536
        %v559 = vpack.c.b16 %v539, %v538
        %v560 = vpack.c.b16 %v541, %v540
        %v561 = vpack.c.b16 %v543, %v542
        %v562 = vpack.c.b16 %v545, %v544
        %v563 = vpack.c.b16 %v547, %v546
        %v596 = vunpack.c.l.b16 %v468
        %v597 = vunpack.c.l.b16 %v469
        %v598 = vunpack.c.l.b16 %v470
        %v599 = vunpack.c.l.b16 %v471
        %v600 = vunpack.c.l.b16 %v472
        %v601 = vunpack.c.l.b16 %v473
        %v602 = vunpack.c.l.b16 %v474
        %v603 = vunpack.c.l.b16 %v475
        %v604 = vunpack.c.l.b16 %v476
        %v605 = vunpack.c.l.b16 %v477
        %v606 = vunpack.c.l.b16 %v478
        %v607 = vunpack.c.l.b16 %v479
        %v608 = vunpack.c.l.b16 %v480
        %v609 = vunpack.c.l.b16 %v481
        %v610 = vunpack.c.l.b16 %v482
        %v611 = vunpack.c.l.b16 %v483
        %v612 = vpack.c.b16 %v597, %v596
        %v613 = vpack.c.b16 %v599, %v598
        %v614 = vpack.c.b16 %v601, %v600
        %v615 = vpack.c.b16 %v603, %v602
        %v616 = vpack.c.b16 %v605, %v604
        %v617 = vpack.c.b16 %v607, %v606
        %v618 = vpack.c.b16 %v609, %v608
        %v619 = vpack.c.b16 %v611, %v610
        %628 = vmatpush.bf16.msra.mxu0 %v619
        %629 = vmatpush.bf16.msra.mxu0 %v618
        %630 = vmatpush.bf16.msra.mxu0 %v617
        %631 = vmatpush.bf16.msra.mxu0 %v616
        %632 = vmatpush.bf16.msra.mxu0 %v615
        %633 = vmatpush.bf16.msra.mxu0 %v614
        %634 = vmatpush.bf16.msra.mxu0 %v613
        %635 = vmatpush.bf16.msra.mxu0 %v612
        %636 = vmatmul.bf16.gmra.mxu0 %v548
        %v637 = vpop.f32.mrf.mxu0
        %v638 = vadd.f32 0.0, %v637
        %v639 = vpop.f32.mrf.mxu0
        %v640 = vadd.f32 0.0, %v639
        %641 = vmatmul.bf16.gmra.mxu0 %v549
        %v642 = vpop.f32.mrf.mxu0
        %v643 = vadd.f32 0.0, %v642
        %v644 = vpop.f32.mrf.mxu0
        %v645 = vadd.f32 0.0, %v644
        %646 = vmatmul.bf16.gmra.mxu0 %v550
        %v647 = vpop.f32.mrf.mxu0
        %v648 = vadd.f32 0.0, %v647
        %v649 = vpop.f32.mrf.mxu0
        %v650 = vadd.f32 0.0, %v649
        %651 = vmatmul.bf16.gmra.mxu0 %v551
        %v652 = vpop.f32.mrf.mxu0
        %v653 = vadd.f32 0.0, %v652
        %v654 = vpop.f32.mrf.mxu0
        %v655 = vadd.f32 0.0, %v654
        %656 = vmatmul.bf16.gmra.mxu0 %v552
        %v657 = vpop.f32.mrf.mxu0
        %v658 = vadd.f32 0.0, %v657
        %v659 = vpop.f32.mrf.mxu0
        %v660 = vadd.f32 0.0, %v659
        %661 = vmatmul.bf16.gmra.mxu0 %v553
        %v662 = vpop.f32.mrf.mxu0
        %v663 = vadd.f32 0.0, %v662
        %v664 = vpop.f32.mrf.mxu0
        %v665 = vadd.f32 0.0, %v664
        %666 = vmatmul.bf16.gmra.mxu0 %v554
        %v667 = vpop.f32.mrf.mxu0
        %v668 = vadd.f32 0.0, %v667
        %v669 = vpop.f32.mrf.mxu0
        %v670 = vadd.f32 0.0, %v669
        %671 = vmatmul.bf16.gmra.mxu0 %v555
        %v672 = vpop.f32.mrf.mxu0
        %v673 = vadd.f32 0.0, %v672
        %v674 = vpop.f32.mrf.mxu0
        %v675 = vadd.f32 0.0, %v674
        %676 = vmatmul.bf16.gmra.mxu0 %v556
        %v677 = vpop.f32.mrf.mxu0
        %v678 = vadd.f32 0.0, %v677
        %v679 = vpop.f32.mrf.mxu0
        %v680 = vadd.f32 0.0, %v679
        %681 = vmatmul.bf16.gmra.mxu0 %v557
        %v682 = vpop.f32.mrf.mxu0
        %v683 = vadd.f32 0.0, %v682
        %v684 = vpop.f32.mrf.mxu0
        %v685 = vadd.f32 0.0, %v684
        %686 = vmatmul.bf16.gmra.mxu0 %v558
        %v687 = vpop.f32.mrf.mxu0
        %v688 = vadd.f32 0.0, %v687
        %v689 = vpop.f32.mrf.mxu0
        %v690 = vadd.f32 0.0, %v689
        %691 = vmatmul.bf16.gmra.mxu0 %v559
        %v692 = vpop.f32.mrf.mxu0
        %v693 = vadd.f32 0.0, %v692
        %v694 = vpop.f32.mrf.mxu0
        %v695 = vadd.f32 0.0, %v694
        %696 = vmatmul.bf16.gmra.mxu0 %v560
        %v697 = vpop.f32.mrf.mxu0
        %v698 = vadd.f32 0.0, %v697
        %v699 = vpop.f32.mrf.mxu0
        %v700 = vadd.f32 0.0, %v699
        %701 = vmatmul.bf16.gmra.mxu0 %v561
        %v702 = vpop.f32.mrf.mxu0
        %v703 = vadd.f32 0.0, %v702
        %v704 = vpop.f32.mrf.mxu0
        %v705 = vadd.f32 0.0, %v704
        %706 = vmatmul.bf16.gmra.mxu0 %v562
        %v707 = vpop.f32.mrf.mxu0
        %v708 = vadd.f32 0.0, %v707
        %v709 = vpop.f32.mrf.mxu0
        %v710 = vadd.f32 0.0, %v709
        %711 = vmatmul.bf16.gmra.mxu0 %v563
        %v712 = vpop.f32.mrf.mxu0
        %v713 = vadd.f32 0.0, %v712
        %v714 = vpop.f32.mrf.mxu0
        %v715 = vadd.f32 0.0, %v714
        %716 = vdwg.mxu0
        %v717 = vpack.c.bf16 %v640, %v638
        %v718 = vpack.c.bf16 %v645, %v643
        %v719 = vpack.c.bf16 %v650, %v648
        %v720 = vpack.c.bf16 %v655, %v653
        %v721 = vpack.c.bf16 %v660, %v658
        %v722 = vpack.c.bf16 %v665, %v663
        %v723 = vpack.c.bf16 %v670, %v668
        %v724 = vpack.c.bf16 %v675, %v673
        %v725 = vpack.c.bf16 %v680, %v678
        %v726 = vpack.c.bf16 %v685, %v683
        %v727 = vpack.c.bf16 %v690, %v688
        %v728 = vpack.c.bf16 %v695, %v693
        %v729 = vpack.c.bf16 %v700, %v698
        %v730 = vpack.c.bf16 %v705, %v703
        %v731 = vpack.c.bf16 %v710, %v708
        %v732 = vpack.c.bf16 %v715, %v713
        %v733 = vld [vmem:[#allocation2] sm:$0xff]
        %v734 = vld [vmem:[#allocation2 + $0x8] sm:$0xff]
        %v735 = vld [vmem:[#allocation2 + $0x10] sm:$0xff]
        %v736 = vld [vmem:[#allocation2 + $0x18] sm:$0xff]
        %v737 = vld [vmem:[#allocation2 + $0x20] sm:$0xff]
        %v738 = vld [vmem:[#allocation2 + $0x28] sm:$0xff]
        %v739 = vld [vmem:[#allocation2 + $0x30] sm:$0xff]
        %v740 = vld [vmem:[#allocation2 + $0x38] sm:$0xff]
        %v741 = vld [vmem:[#allocation2 + $0x40] sm:$0xff]
        %v742 = vld [vmem:[#allocation2 + $0x48] sm:$0xff]
        %v743 = vld [vmem:[#allocation2 + $0x50] sm:$0xff]
        %v744 = vld [vmem:[#allocation2 + $0x58] sm:$0xff]
        %v745 = vld [vmem:[#allocation2 + $0x60] sm:$0xff]
        %v746 = vld [vmem:[#allocation2 + $0x68] sm:$0xff]
        %v747 = vld [vmem:[#allocation2 + $0x70] sm:$0xff]
        %v748 = vld [vmem:[#allocation2 + $0x78] sm:$0xff]
        %v749 = vld [vmem:[#allocation2 + $0x80] sm:$0xff]
        %v750 = vld [vmem:[#allocation2 + $0x88] sm:$0xff]
        %v751 = vld [vmem:[#allocation2 + $0x90] sm:$0xff]
        %v752 = vld [vmem:[#allocation2 + $0x98] sm:$0xff]
        %v753 = vld [vmem:[#allocation2 + $0xa0] sm:$0xff]
        %v754 = vld [vmem:[#allocation2 + $0xa8] sm:$0xff]
        %v755 = vld [vmem:[#allocation2 + $0xb0] sm:$0xff]
        %v756 = vld [vmem:[#allocation2 + $0xb8] sm:$0xff]
        %v757 = vld [vmem:[#allocation2 + $0xc0] sm:$0xff]
        %v758 = vld [vmem:[#allocation2 + $0xc8] sm:$0xff]
        %v759 = vld [vmem:[#allocation2 + $0xd0] sm:$0xff]
        %v760 = vld [vmem:[#allocation2 + $0xd8] sm:$0xff]
        %v761 = vld [vmem:[#allocation2 + $0xe0] sm:$0xff]
        %v762 = vld [vmem:[#allocation2 + $0xe8] sm:$0xff]
        %v763 = vld [vmem:[#allocation2 + $0xf0] sm:$0xff]
        %v764 = vld [vmem:[#allocation2 + $0xf8] sm:$0xff]
        %v765 = vld [vmem:[%s358] sm:$0xff]
        %v766 = vld [vmem:[%s358 + $0x8] sm:$0xff]
        %v767 = vld [vmem:[%s358 + $0x10] sm:$0xff]
        %v768 = vld [vmem:[%s358 + $0x18] sm:$0xff]
        %v769 = vld [vmem:[%s358 + $0x20] sm:$0xff]
        %v770 = vld [vmem:[%s358 + $0x28] sm:$0xff]
        %v771 = vld [vmem:[%s358 + $0x30] sm:$0xff]
        %v772 = vld [vmem:[%s358 + $0x38] sm:$0xff]
        %v773 = vld [vmem:[%s358 + $0x40] sm:$0xff]
        %v774 = vld [vmem:[%s358 + $0x48] sm:$0xff]
        %v775 = vld [vmem:[%s358 + $0x50] sm:$0xff]
        %v776 = vld [vmem:[%s358 + $0x58] sm:$0xff]
        %v777 = vld [vmem:[%s358 + $0x60] sm:$0xff]
        %v778 = vld [vmem:[%s358 + $0x68] sm:$0xff]
        %v779 = vld [vmem:[%s358 + $0x70] sm:$0xff]
        %v780 = vld [vmem:[%s358 + $0x78] sm:$0xff]
        %v781 = vld [vmem:[%s358 + $0x80] sm:$0xff]
        %v782 = vld [vmem:[%s358 + $0x88] sm:$0xff]
        %v783 = vld [vmem:[%s358 + $0x90] sm:$0xff]
        %v784 = vld [vmem:[%s358 + $0x98] sm:$0xff]
        %v785 = vld [vmem:[%s358 + $0xa0] sm:$0xff]
        %v786 = vld [vmem:[%s358 + $0xa8] sm:$0xff]
        %v787 = vld [vmem:[%s358 + $0xb0] sm:$0xff]
        %v788 = vld [vmem:[%s358 + $0xb8] sm:$0xff]
        %v789 = vld [vmem:[%s358 + $0xc0] sm:$0xff]
        %v790 = vld [vmem:[%s358 + $0xc8] sm:$0xff]
        %v791 = vld [vmem:[%s358 + $0xd0] sm:$0xff]
        %v792 = vld [vmem:[%s358 + $0xd8] sm:$0xff]
        %v793 = vld [vmem:[%s358 + $0xe0] sm:$0xff]
        %v794 = vld [vmem:[%s358 + $0xe8] sm:$0xff]
        %v795 = vld [vmem:[%s358 + $0xf0] sm:$0xff]
        %v796 = vld [vmem:[%s358 + $0xf8] sm:$0xff]
        %v829 = vunpack.c.l.b16 %v765
        %v830 = vunpack.c.h.b16 %v765
        %v831 = vunpack.c.l.b16 %v766
        %v832 = vunpack.c.h.b16 %v766
        %v833 = vunpack.c.l.b16 %v767
        %v834 = vunpack.c.h.b16 %v767
        %v835 = vunpack.c.l.b16 %v768
        %v836 = vunpack.c.h.b16 %v768
        %v837 = vunpack.c.l.b16 %v769
        %v838 = vunpack.c.h.b16 %v769
        %v839 = vunpack.c.l.b16 %v770
        %v840 = vunpack.c.h.b16 %v770
        %v841 = vunpack.c.l.b16 %v771
        %v842 = vunpack.c.h.b16 %v771
        %v843 = vunpack.c.l.b16 %v772
        %v844 = vunpack.c.h.b16 %v772
        %v845 = vunpack.c.l.b16 %v773
        %v846 = vunpack.c.h.b16 %v773
        %v847 = vunpack.c.l.b16 %v774
        %v848 = vunpack.c.h.b16 %v774
        %v849 = vunpack.c.l.b16 %v775
        %v850 = vunpack.c.h.b16 %v775
        %v851 = vunpack.c.l.b16 %v776
        %v852 = vunpack.c.h.b16 %v776
        %v853 = vunpack.c.l.b16 %v777
        %v854 = vunpack.c.h.b16 %v777
        %v855 = vunpack.c.l.b16 %v778
        %v856 = vunpack.c.h.b16 %v778
        %v857 = vunpack.c.l.b16 %v779
        %v858 = vunpack.c.h.b16 %v779
        %v859 = vunpack.c.l.b16 %v780
        %v860 = vunpack.c.h.b16 %v780
        %v861 = vunpack.c.l.b16 %v781
        %v862 = vunpack.c.h.b16 %v781
        %v863 = vunpack.c.l.b16 %v782
        %v864 = vunpack.c.h.b16 %v782
        %v865 = vunpack.c.l.b16 %v783
        %v866 = vunpack.c.h.b16 %v783
        %v867 = vunpack.c.l.b16 %v784
        %v868 = vunpack.c.h.b16 %v784
        %v869 = vunpack.c.l.b16 %v785
        %v870 = vunpack.c.h.b16 %v785
        %v871 = vunpack.c.l.b16 %v786
        %v872 = vunpack.c.h.b16 %v786
        %v873 = vunpack.c.l.b16 %v787
        %v874 = vunpack.c.h.b16 %v787
        %v875 = vunpack.c.l.b16 %v788
        %v876 = vunpack.c.h.b16 %v788
        %v877 = vunpack.c.l.b16 %v789
        %v878 = vunpack.c.h.b16 %v789
        %v879 = vunpack.c.l.b16 %v790
        %v880 = vunpack.c.h.b16 %v790
        %v881 = vunpack.c.l.b16 %v791
        %v882 = vunpack.c.h.b16 %v791
        %v883 = vunpack.c.l.b16 %v792
        %v884 = vunpack.c.h.b16 %v792
        %v885 = vunpack.c.l.b16 %v793
        %v886 = vunpack.c.h.b16 %v793
        %v887 = vunpack.c.l.b16 %v794
        %v888 = vunpack.c.h.b16 %v794
        %v889 = vunpack.c.l.b16 %v795
        %v890 = vunpack.c.h.b16 %v795
        %v891 = vunpack.c.l.b16 %v796
        %v892 = vunpack.c.h.b16 %v796
        %v893 = vpack.c.b16 %v831, %v829
        %v894 = vpack.c.b16 %v832, %v830
        %v895 = vpack.c.b16 %v835, %v833
        %v896 = vpack.c.b16 %v836, %v834
        %v897 = vpack.c.b16 %v839, %v837
        %v898 = vpack.c.b16 %v840, %v838
        %v899 = vpack.c.b16 %v843, %v841
        %v900 = vpack.c.b16 %v844, %v842
        %v901 = vpack.c.b16 %v847, %v845
        %v902 = vpack.c.b16 %v848, %v846
        %v903 = vpack.c.b16 %v851, %v849
        %v904 = vpack.c.b16 %v852, %v850
        %v905 = vpack.c.b16 %v855, %v853
        %v906 = vpack.c.b16 %v856, %v854
        %v907 = vpack.c.b16 %v859, %v857
        %v908 = vpack.c.b16 %v860, %v858
        %v909 = vpack.c.b16 %v863, %v861
        %v910 = vpack.c.b16 %v864, %v862
        %v911 = vpack.c.b16 %v867, %v865
        %v912 = vpack.c.b16 %v868, %v866
        %v913 = vpack.c.b16 %v871, %v869
        %v914 = vpack.c.b16 %v872, %v870
        %v915 = vpack.c.b16 %v875, %v873
        %v916 = vpack.c.b16 %v876, %v874
        %v917 = vpack.c.b16 %v879, %v877
        %v918 = vpack.c.b16 %v880, %v878
        %v919 = vpack.c.b16 %v883, %v881
        %v920 = vpack.c.b16 %v884, %v882
        %v921 = vpack.c.b16 %v887, %v885
        %v922 = vpack.c.b16 %v888, %v886
        %v923 = vpack.c.b16 %v891, %v889
        %v924 = vpack.c.b16 %v892, %v890
        %957 = vmatpush.bf16.msra.mxu0 %v724
        %958 = vmatpush.bf16.msra.mxu0 %v723
        %959 = vmatpush.bf16.msra.mxu0 %v722
        %960 = vmatpush.bf16.msra.mxu0 %v721
        %961 = vmatpush.bf16.msra.mxu0 %v720
        %962 = vmatpush.bf16.msra.mxu0 %v719
        %963 = vmatpush.bf16.msra.mxu0 %v718
        %964 = vmatpush.bf16.msra.mxu0 %v717
        %965 = vmatmul.bf16.gmra.mxu0 %v893
        %v966 = vpop.f32.mrf.mxu0
        %v967 = vadd.f32 0.0, %v966
        %v968 = vpop.f32.mrf.mxu0
        %v969 = vadd.f32 0.0, %v968
        %970 = vmatmul.bf16.gmra.mxu0 %v895
        %v971 = vpop.f32.mrf.mxu0
        %v972 = vadd.f32 0.0, %v971
        %v973 = vpop.f32.mrf.mxu0
        %v974 = vadd.f32 0.0, %v973
        %975 = vmatmul.bf16.gmra.mxu0 %v897
        %v976 = vpop.f32.mrf.mxu0
        %v977 = vadd.f32 0.0, %v976
        %v978 = vpop.f32.mrf.mxu0
        %v979 = vadd.f32 0.0, %v978
        %980 = vmatmul.bf16.gmra.mxu0 %v899
        %v981 = vpop.f32.mrf.mxu0
        %v982 = vadd.f32 0.0, %v981
        %v983 = vpop.f32.mrf.mxu0
        %v984 = vadd.f32 0.0, %v983
        %985 = vmatmul.bf16.gmra.mxu0 %v901
        %v986 = vpop.f32.mrf.mxu0
        %v987 = vadd.f32 0.0, %v986
        %v988 = vpop.f32.mrf.mxu0
        %v989 = vadd.f32 0.0, %v988
        %990 = vmatmul.bf16.gmra.mxu0 %v903
        %v991 = vpop.f32.mrf.mxu0
        %v992 = vadd.f32 0.0, %v991
        %v993 = vpop.f32.mrf.mxu0
        %v994 = vadd.f32 0.0, %v993
        %995 = vmatmul.bf16.gmra.mxu0 %v905
        %v996 = vpop.f32.mrf.mxu0
        %v997 = vadd.f32 0.0, %v996
        %v998 = vpop.f32.mrf.mxu0
        %v999 = vadd.f32 0.0, %v998
        %1000 = vmatmul.bf16.gmra.mxu0 %v907
        %v1001 = vpop.f32.mrf.mxu0
        %v1002 = vadd.f32 0.0, %v1001
        %v1003 = vpop.f32.mrf.mxu0
        %v1004 = vadd.f32 0.0, %v1003
        %1005 = vmatmul.bf16.gmra.mxu0 %v909
        %v1006 = vpop.f32.mrf.mxu0
        %v1007 = vadd.f32 0.0, %v1006
        %v1008 = vpop.f32.mrf.mxu0
        %v1009 = vadd.f32 0.0, %v1008
        %1010 = vmatmul.bf16.gmra.mxu0 %v911
        %v1011 = vpop.f32.mrf.mxu0
        %v1012 = vadd.f32 0.0, %v1011
        %v1013 = vpop.f32.mrf.mxu0
        %v1014 = vadd.f32 0.0, %v1013
        %1015 = vmatmul.bf16.gmra.mxu0 %v913
        %v1016 = vpop.f32.mrf.mxu0
        %v1017 = vadd.f32 0.0, %v1016
        %v1018 = vpop.f32.mrf.mxu0
        %v1019 = vadd.f32 0.0, %v1018
        %1020 = vmatmul.bf16.gmra.mxu0 %v915
        %v1021 = vpop.f32.mrf.mxu0
        %v1022 = vadd.f32 0.0, %v1021
        %v1023 = vpop.f32.mrf.mxu0
        %v1024 = vadd.f32 0.0, %v1023
        %1025 = vmatmul.bf16.gmra.mxu0 %v917
        %v1026 = vpop.f32.mrf.mxu0
        %v1027 = vadd.f32 0.0, %v1026
        %v1028 = vpop.f32.mrf.mxu0
        %v1029 = vadd.f32 0.0, %v1028
        %1030 = vmatmul.bf16.gmra.mxu0 %v919
        %v1031 = vpop.f32.mrf.mxu0
        %v1032 = vadd.f32 0.0, %v1031
        %v1033 = vpop.f32.mrf.mxu0
        %v1034 = vadd.f32 0.0, %v1033
        %1035 = vmatmul.bf16.gmra.mxu0 %v921
        %v1036 = vpop.f32.mrf.mxu0
        %v1037 = vadd.f32 0.0, %v1036
        %v1038 = vpop.f32.mrf.mxu0
        %v1039 = vadd.f32 0.0, %v1038
        %1040 = vmatmul.bf16.gmra.mxu0 %v923
        %v1041 = vpop.f32.mrf.mxu0
        %v1042 = vadd.f32 0.0, %v1041
        %v1043 = vpop.f32.mrf.mxu0
        %v1044 = vadd.f32 0.0, %v1043
        %1045 = vdwg.mxu0
        %1046 = vmatpush.bf16.msra.mxu0 %v732
        %1047 = vmatpush.bf16.msra.mxu0 %v731
        %1048 = vmatpush.bf16.msra.mxu0 %v730
        %1049 = vmatpush.bf16.msra.mxu0 %v729
        %1050 = vmatpush.bf16.msra.mxu0 %v728
        %1051 = vmatpush.bf16.msra.mxu0 %v727
        %1052 = vmatpush.bf16.msra.mxu0 %v726
        %1053 = vmatpush.bf16.msra.mxu0 %v725
        %1054 = vmatmul.bf16.gmra.mxu0 %v894
        %v1055 = vpop.f32.mrf.mxu0
        %v1056 = vadd.f32 %v967, %v1055
        %v1057 = vpop.f32.mrf.mxu0
        %v1058 = vadd.f32 %v969, %v1057
        %1059 = vmatmul.bf16.gmra.mxu0 %v896
        %v1060 = vpop.f32.mrf.mxu0
        %v1061 = vadd.f32 %v972, %v1060
        %v1062 = vpop.f32.mrf.mxu0
        %v1063 = vadd.f32 %v974, %v1062
        %1064 = vmatmul.bf16.gmra.mxu0 %v898
        %v1065 = vpop.f32.mrf.mxu0
        %v1066 = vadd.f32 %v977, %v1065
        %v1067 = vpop.f32.mrf.mxu0
        %v1068 = vadd.f32 %v979, %v1067
        %1069 = vmatmul.bf16.gmra.mxu0 %v900
        %v1070 = vpop.f32.mrf.mxu0
        %v1071 = vadd.f32 %v982, %v1070
        %v1072 = vpop.f32.mrf.mxu0
        %v1073 = vadd.f32 %v984, %v1072
        %1074 = vmatmul.bf16.gmra.mxu0 %v902
        %v1075 = vpop.f32.mrf.mxu0
        %v1076 = vadd.f32 %v987, %v1075
        %v1077 = vpop.f32.mrf.mxu0
        %v1078 = vadd.f32 %v989, %v1077
        %1079 = vmatmul.bf16.gmra.mxu0 %v904
        %v1080 = vpop.f32.mrf.mxu0
        %v1081 = vadd.f32 %v992, %v1080
        %v1082 = vpop.f32.mrf.mxu0
        %v1083 = vadd.f32 %v994, %v1082
        %1084 = vmatmul.bf16.gmra.mxu0 %v906
        %v1085 = vpop.f32.mrf.mxu0
        %v1086 = vadd.f32 %v997, %v1085
        %v1087 = vpop.f32.mrf.mxu0
        %v1088 = vadd.f32 %v999, %v1087
        %1089 = vmatmul.bf16.gmra.mxu0 %v908
        %v1090 = vpop.f32.mrf.mxu0
        %v1091 = vadd.f32 %v1002, %v1090
        %v1092 = vpop.f32.mrf.mxu0
        %v1093 = vadd.f32 %v1004, %v1092
        %1094 = vmatmul.bf16.gmra.mxu0 %v910
        %v1095 = vpop.f32.mrf.mxu0
        %v1096 = vadd.f32 %v1007, %v1095
        %v1097 = vpop.f32.mrf.mxu0
        %v1098 = vadd.f32 %v1009, %v1097
        %1099 = vmatmul.bf16.gmra.mxu0 %v912
        %v1100 = vpop.f32.mrf.mxu0
        %v1101 = vadd.f32 %v1012, %v1100
        %v1102 = vpop.f32.mrf.mxu0
        %v1103 = vadd.f32 %v1014, %v1102
        %1104 = vmatmul.bf16.gmra.mxu0 %v914
        %v1105 = vpop.f32.mrf.mxu0
        %v1106 = vadd.f32 %v1017, %v1105
        %v1107 = vpop.f32.mrf.mxu0
        %v1108 = vadd.f32 %v1019, %v1107
        %1109 = vmatmul.bf16.gmra.mxu0 %v916
        %v1110 = vpop.f32.mrf.mxu0
        %v1111 = vadd.f32 %v1022, %v1110
        %v1112 = vpop.f32.mrf.mxu0
        %v1113 = vadd.f32 %v1024, %v1112
        %1114 = vmatmul.bf16.gmra.mxu0 %v918
        %v1115 = vpop.f32.mrf.mxu0
        %v1116 = vadd.f32 %v1027, %v1115
        %v1117 = vpop.f32.mrf.mxu0
        %v1118 = vadd.f32 %v1029, %v1117
        %1119 = vmatmul.bf16.gmra.mxu0 %v920
        %v1120 = vpop.f32.mrf.mxu0
        %v1121 = vadd.f32 %v1032, %v1120
        %v1122 = vpop.f32.mrf.mxu0
        %v1123 = vadd.f32 %v1034, %v1122
        %1124 = vmatmul.bf16.gmra.mxu0 %v922
        %v1125 = vpop.f32.mrf.mxu0
        %v1126 = vadd.f32 %v1037, %v1125
        %v1127 = vpop.f32.mrf.mxu0
        %v1128 = vadd.f32 %v1039, %v1127
        %1129 = vmatmul.bf16.gmra.mxu0 %v924
        %v1130 = vpop.f32.mrf.mxu0
        %v1131 = vadd.f32 %v1042, %v1130
        %v1132 = vpop.f32.mrf.mxu0
        %v1133 = vadd.f32 %v1044, %v1132
        %1134 = vdwg.mxu0
        %v1135 = vadd.f32 %v733, %v1056
        %v1136 = vadd.f32 %v734, %v1058
        %v1137 = vadd.f32 %v735, %v1061
        %v1138 = vadd.f32 %v736, %v1063
        %v1139 = vadd.f32 %v737, %v1066
        %v1140 = vadd.f32 %v738, %v1068
        %v1141 = vadd.f32 %v739, %v1071
        %v1142 = vadd.f32 %v740, %v1073
        %v1143 = vadd.f32 %v741, %v1076
        %v1144 = vadd.f32 %v742, %v1078
        %v1145 = vadd.f32 %v743, %v1081
        %v1146 = vadd.f32 %v744, %v1083
        %v1147 = vadd.f32 %v745, %v1086
        %v1148 = vadd.f32 %v746, %v1088
        %v1149 = vadd.f32 %v747, %v1091
        %v1150 = vadd.f32 %v748, %v1093
        %v1151 = vadd.f32 %v749, %v1096
        %v1152 = vadd.f32 %v750, %v1098
        %v1153 = vadd.f32 %v751, %v1101
        %v1154 = vadd.f32 %v752, %v1103
        %v1155 = vadd.f32 %v753, %v1106
        %v1156 = vadd.f32 %v754, %v1108
        %v1157 = vadd.f32 %v755, %v1111
        %v1158 = vadd.f32 %v756, %v1113
        %v1159 = vadd.f32 %v757, %v1116
        %v1160 = vadd.f32 %v758, %v1118
        %v1161 = vadd.f32 %v759, %v1121
        %v1162 = vadd.f32 %v760, %v1123
        %v1163 = vadd.f32 %v761, %v1126
        %v1164 = vadd.f32 %v762, %v1128
        %v1165 = vadd.f32 %v763, %v1131
        %v1166 = vadd.f32 %v764, %v1133
        %1167 = vst [vmem:[#allocation2] sm:$0xff] %v1135
        %1168 = vst [vmem:[#allocation2 + $0x8] sm:$0xff] %v1136
        %1169 = vst [vmem:[#allocation2 + $0x10] sm:$0xff] %v1137
        %1170 = vst [vmem:[#allocation2 + $0x18] sm:$0xff] %v1138
        %1171 = vst [vmem:[#allocation2 + $0x20] sm:$0xff] %v1139
        %1172 = vst [vmem:[#allocation2 + $0x28] sm:$0xff] %v1140
        %1173 = vst [vmem:[#allocation2 + $0x30] sm:$0xff] %v1141
        %1174 = vst [vmem:[#allocation2 + $0x38] sm:$0xff] %v1142
        %1175 = vst [vmem:[#allocation2 + $0x40] sm:$0xff] %v1143
        %1176 = vst [vmem:[#allocation2 + $0x48] sm:$0xff] %v1144
        %1177 = vst [vmem:[#allocation2 + $0x50] sm:$0xff] %v1145
        %1178 = vst [vmem:[#allocation2 + $0x58] sm:$0xff] %v1146
        %1179 = vst [vmem:[#allocation2 + $0x60] sm:$0xff] %v1147
        %1180 = vst [vmem:[#allocation2 + $0x68] sm:$0xff] %v1148
        %1181 = vst [vmem:[#allocation2 + $0x70] sm:$0xff] %v1149
        %1182 = vst [vmem:[#allocation2 + $0x78] sm:$0xff] %v1150
        %1183 = vst [vmem:[#allocation2 + $0x80] sm:$0xff] %v1151
        %1184 = vst [vmem:[#allocation2 + $0x88] sm:$0xff] %v1152
        %1185 = vst [vmem:[#allocation2 + $0x90] sm:$0xff] %v1153
        %1186 = vst [vmem:[#allocation2 + $0x98] sm:$0xff] %v1154
        %1187 = vst [vmem:[#allocation2 + $0xa0] sm:$0xff] %v1155
        %1188 = vst [vmem:[#allocation2 + $0xa8] sm:$0xff] %v1156
        %1189 = vst [vmem:[#allocation2 + $0xb0] sm:$0xff] %v1157
        %1190 = vst [vmem:[#allocation2 + $0xb8] sm:$0xff] %v1158
        %1191 = vst [vmem:[#allocation2 + $0xc0] sm:$0xff] %v1159
        %1192 = vst [vmem:[#allocation2 + $0xc8] sm:$0xff] %v1160
        %1193 = vst [vmem:[#allocation2 + $0xd0] sm:$0xff] %v1161
        %1194 = vst [vmem:[#allocation2 + $0xd8] sm:$0xff] %v1162
        %1195 = vst [vmem:[#allocation2 + $0xe0] sm:$0xff] %v1163
        %1196 = vst [vmem:[#allocation2 + $0xe8] sm:$0xff] %v1164
        %1197 = vst [vmem:[#allocation2 + $0xf0] sm:$0xff] %v1165
        %1198 = vst [vmem:[#allocation2 + $0xf8] sm:$0xff] %v1166
        %p1199 = scmp.eq.s32.totalorder %s20, 1
        // Predicated region
        $region79: #{gcn_forward.3} parent=69 // pred_check
          %p1200 = pneg %p1199
        $region80: #{gcn_forward.3} parent=69 // pred_check_branch
          %1202 = sbr.rel (%p1200) target = $region82
        $region81: #{gcn_forward.3} parent=69 // pred_region
          %v1203 = vld [vmem:[#allocation2] sm:$0xff]
          %v1204 = vld [vmem:[#allocation2 + $0x8] sm:$0xff]
          %v1205 = vld [vmem:[#allocation2 + $0x10] sm:$0xff]
          %v1206 = vld [vmem:[#allocation2 + $0x18] sm:$0xff]
          %v1207 = vld [vmem:[#allocation2 + $0x20] sm:$0xff]
          %v1208 = vld [vmem:[#allocation2 + $0x28] sm:$0xff]
          %v1209 = vld [vmem:[#allocation2 + $0x30] sm:$0xff]
          %v1210 = vld [vmem:[#allocation2 + $0x38] sm:$0xff]
          %v1211 = vld [vmem:[#allocation2 + $0x40] sm:$0xff]
          %v1212 = vld [vmem:[#allocation2 + $0x48] sm:$0xff]
          %v1213 = vld [vmem:[#allocation2 + $0x50] sm:$0xff]
          %v1214 = vld [vmem:[#allocation2 + $0x58] sm:$0xff]
          %v1215 = vld [vmem:[#allocation2 + $0x60] sm:$0xff]
          %v1216 = vld [vmem:[#allocation2 + $0x68] sm:$0xff]
          %v1217 = vld [vmem:[#allocation2 + $0x70] sm:$0xff]
          %v1218 = vld [vmem:[#allocation2 + $0x78] sm:$0xff]
          %v1219 = vld [vmem:[#allocation2 + $0x80] sm:$0xff]
          %v1220 = vld [vmem:[#allocation2 + $0x88] sm:$0xff]
          %v1221 = vld [vmem:[#allocation2 + $0x90] sm:$0xff]
          %v1222 = vld [vmem:[#allocation2 + $0x98] sm:$0xff]
          %v1223 = vld [vmem:[#allocation2 + $0xa0] sm:$0xff]
          %v1224 = vld [vmem:[#allocation2 + $0xa8] sm:$0xff]
          %v1225 = vld [vmem:[#allocation2 + $0xb0] sm:$0xff]
          %v1226 = vld [vmem:[#allocation2 + $0xb8] sm:$0xff]
          %v1227 = vld [vmem:[#allocation2 + $0xc0] sm:$0xff]
          %v1228 = vld [vmem:[#allocation2 + $0xc8] sm:$0xff]
          %v1229 = vld [vmem:[#allocation2 + $0xd0] sm:$0xff]
          %v1230 = vld [vmem:[#allocation2 + $0xd8] sm:$0xff]
          %v1231 = vld [vmem:[#allocation2 + $0xe0] sm:$0xff]
          %v1232 = vld [vmem:[#allocation2 + $0xe8] sm:$0xff]
          %v1233 = vld [vmem:[#allocation2 + $0xf0] sm:$0xff]
          %v1234 = vld [vmem:[#allocation2 + $0xf8] sm:$0xff]
          %v1235 = vld [vmem:[%s3] sm:$0x1]
          %v1237 = vperm.slane %v1235, 0
          %v1239 = vadd.f32 %v1203, %v1237
          %v1240 = vadd.f32 %v1204, %v1237
          %v1241 = vadd.f32 %v1205, %v1237
          %v1242 = vadd.f32 %v1206, %v1237
          %v1243 = vadd.f32 %v1207, %v1237
          %v1244 = vadd.f32 %v1208, %v1237
          %v1245 = vadd.f32 %v1209, %v1237
          %v1246 = vadd.f32 %v1210, %v1237
          %v1247 = vadd.f32 %v1211, %v1237
          %v1248 = vadd.f32 %v1212, %v1237
          %v1249 = vadd.f32 %v1213, %v1237
          %v1250 = vadd.f32 %v1214, %v1237
          %v1251 = vadd.f32 %v1215, %v1237
          %v1252 = vadd.f32 %v1216, %v1237
          %v1253 = vadd.f32 %v1217, %v1237
          %v1254 = vadd.f32 %v1218, %v1237
          %v1255 = vadd.f32 %v1219, %v1237
          %v1256 = vadd.f32 %v1220, %v1237
          %v1257 = vadd.f32 %v1221, %v1237
          %v1258 = vadd.f32 %v1222, %v1237
          %v1259 = vadd.f32 %v1223, %v1237
          %v1260 = vadd.f32 %v1224, %v1237
          %v1261 = vadd.f32 %v1225, %v1237
          %v1262 = vadd.f32 %v1226, %v1237
          %v1263 = vadd.f32 %v1227, %v1237
          %v1264 = vadd.f32 %v1228, %v1237
          %v1265 = vadd.f32 %v1229, %v1237
          %v1266 = vadd.f32 %v1230, %v1237
          %v1267 = vadd.f32 %v1231, %v1237
          %v1268 = vadd.f32 %v1232, %v1237
          %v1269 = vadd.f32 %v1233, %v1237
          %v1270 = vadd.f32 %v1234, %v1237
          %1271 = vst [vmem:[%s398] sm:$0xff] %v1239
          %1272 = vst [vmem:[%s398 + $0x8] sm:$0xff] %v1240
          %1273 = vst [vmem:[%s398 + $0x10] sm:$0xff] %v1241
          %1274 = vst [vmem:[%s398 + $0x18] sm:$0xff] %v1242
          %1275 = vst [vmem:[%s398 + $0x20] sm:$0xff] %v1243
          %1276 = vst [vmem:[%s398 + $0x28] sm:$0xff] %v1244
          %1277 = vst [vmem:[%s398 + $0x30] sm:$0xff] %v1245
          %1278 = vst [vmem:[%s398 + $0x38] sm:$0xff] %v1246
          %1279 = vst [vmem:[%s398 + $0x40] sm:$0xff] %v1247
          %1280 = vst [vmem:[%s398 + $0x48] sm:$0xff] %v1248
          %1281 = vst [vmem:[%s398 + $0x50] sm:$0xff] %v1249
          %1282 = vst [vmem:[%s398 + $0x58] sm:$0xff] %v1250
          %1283 = vst [vmem:[%s398 + $0x60] sm:$0xff] %v1251
          %1284 = vst [vmem:[%s398 + $0x68] sm:$0xff] %v1252
          %1285 = vst [vmem:[%s398 + $0x70] sm:$0xff] %v1253
          %1286 = vst [vmem:[%s398 + $0x78] sm:$0xff] %v1254
          %1287 = vst [vmem:[%s398 + $0x80] sm:$0xff] %v1255
          %1288 = vst [vmem:[%s398 + $0x88] sm:$0xff] %v1256
          %1289 = vst [vmem:[%s398 + $0x90] sm:$0xff] %v1257
          %1290 = vst [vmem:[%s398 + $0x98] sm:$0xff] %v1258
          %1291 = vst [vmem:[%s398 + $0xa0] sm:$0xff] %v1259
          %1292 = vst [vmem:[%s398 + $0xa8] sm:$0xff] %v1260
          %1293 = vst [vmem:[%s398 + $0xb0] sm:$0xff] %v1261
          %1294 = vst [vmem:[%s398 + $0xb8] sm:$0xff] %v1262
          %1295 = vst [vmem:[%s398 + $0xc0] sm:$0xff] %v1263
          %1296 = vst [vmem:[%s398 + $0xc8] sm:$0xff] %v1264
          %1297 = vst [vmem:[%s398 + $0xd0] sm:$0xff] %v1265
          %1298 = vst [vmem:[%s398 + $0xd8] sm:$0xff] %v1266
          %1299 = vst [vmem:[%s398 + $0xe0] sm:$0xff] %v1267
          %1300 = vst [vmem:[%s398 + $0xe8] sm:$0xff] %v1268
          %1301 = vst [vmem:[%s398 + $0xf0] sm:$0xff] %v1269
          %1302 = vst [vmem:[%s398 + $0xf8] sm:$0xff] %v1270
        $region82: #{gcn_forward.3} parent=69 // pred_fallthru
          _
        %s1303 = smul.u32 32, %s19
        %p1304 = scmp.lt.s32.totalorder %s1303, 63
        %s1305 = scalar_select %p1304, %s1303, 63
        %s1306 = smul.addr %s1305, 8
        %s1307 = scalar_lea.vmem %s4, %s1306
        // Predicated region
        $region83: #{gcn_forward.3} parent=69 // pred_check
          %p1308 = pneg %p141
        $region84: #{gcn_forward.3} parent=69 // pred_check_branch
          %1310 = sbr.rel (%p1308) target = $region86
        $region85: #{gcn_forward.3} parent=69 // pred_region
          %s1311 = smul.u32 32, %s19
        $region86: #{gcn_forward.3} parent=69 // pred_fallthru
          _
      $region70: #{gcn_forward.3} parent=5 // pred_fallthru
        _
      %p1312 = scmp.le.s32.totalorder 2, %s10
      // Predicated region
      $region87: #{gcn_forward.3} parent=5 // pred_check
        %p1313 = pneg %p1312
      $region88: #{gcn_forward.3} parent=5 // pred_check_branch
        %1315 = sbr.rel (%p1313) target = $region90
      $region89: #{gcn_forward.3} parent=5 // pred_region
        %s1316 = ssub.s32 %s10, 2
        // Predicated region
        $region91: #{gcn_forward.3} parent=89 // pred_check
          %p1317 = pneg %p147
        $region92: #{gcn_forward.3} parent=89 // pred_check_branch
          %1319 = sbr.rel (%p1317) target = $region94
        $region93: #{gcn_forward.3} parent=89 // pred_region
          %s1320 = smul.u32 32, %s21
          %p1321 = scmp.lt.s32.totalorder %s1320, 63
          %s1322 = scalar_select %p1321, %s1320, 63
          %s1323 = smul.addr %s1322, 8
          %s1324 = scalar_lea.vmem %s4, %s1323
        $region94: #{gcn_forward.3} parent=89 // pred_fallthru
          _
      $region90: #{gcn_forward.3} parent=5 // pred_fallthru
        _
    $region6: #{gcn_forward.3} parent=1 // loop_footer
      %s14 = sadd.s32 1, %s10
    $region7: #{gcn_forward.3} parent=1 // loop_footer_branch
      %9 = sbr.rel target = $region3
    $region8: #{gcn_forward.3} parent=1 // loop_exit
      _

// kernel: gcn_forward.2
$region0: #{gcn_forward.2}
  #allocation0 [shape = 'u32[]', space=smem, size = 0x4, offset = 0x4, fixed_abs, tag = 'smem constant byte address 0x4 - core index']
  #allocation1 [shape = 'u32[72,128]{1,0:T(1,128)}', space=vmem, size = 0x9000, scoped, tag = 'internal scratch']
  #allocation2 [shape = 'f32[256,128]{1,0:T(8,128)}', space=vmem, size = 0x20000, scoped, tag = 'scratch operand']
  %s0 = inlined_call_operand.vmem [shape: bf16[512,512], index: 0, kind: input, shape index: {}]
  %s1 = inlined_call_operand.vmem [shape: bf16[512,16], index: 1, kind: input, shape index: {}]
  %s2 = inlined_call_operand.vmem [shape: bf16[16,128], index: 2, kind: input, shape index: {}]
  %s3 = inlined_call_operand.vmem [shape: f32[1,128], index: 3, kind: input, shape index: {}]
  %s4 = inlined_call_operand.vmem [shape: bf16[512,128], index: 4, kind: output, shape index: {}]
  %s5 = sld [smem:[#allocation0]]
  $region95: #{gcn_forward.2} parent=0
    _
  %s7 = ssub.s32 1, %s5
  %s8 = scalar_select 0, %s7, %s5
  $region1: #{gcn_forward.2} parent=0
    #allocation3 [shape = 'u8[262144]{0}', space=vmem, size = 0x40000, scoped, tag = 'input window, operand 0']
    loop: start=0, step=1, limit=6
    $region2: #{gcn_forward.2} parent=1 // loop_pre_header
      _
    $region3: #{gcn_forward.2} parent=1 // loop_header
      %s10 = sphi 0, %s14
      %p11 = scmp.ge.s32.totalorder %s10, 6
      %s17 = sphi 0, %s29
      %s18 = sphi 0, %s25
      %s19 = sphi 0, %s17
      %s20 = sphi 0, %s18
      %s21 = sphi 0, %s19
      %s22 = sphi 0, %s20
      %s34 = sphi 0, %s36
      %s37 = sphi 0, %s34
      %s38 = sphi 0, %s37
      %s54 = sphi 0, %s38
      %s60 = sphi 0, %s62
      %s63 = sphi 0, %s60
      %s64 = sphi 0, %s63
      %s80 = sphi 0, %s64
      %s84 = sphi 0, %s84
      %s86 = sphi 0, %s84
      %s87 = sphi 0, %s86
      %s101 = sphi 0, %s87
      %s105 = sphi 0, %s105
      %s107 = sphi 0, %s105
      %s108 = sphi 0, %s107
      %s122 = sphi 0, %s108
      %s128 = sphi 0, %s130
      %s131 = sphi 0, %s128
      %s132 = sphi 0, %s131
      %s148 = sphi 0, %s132
    $region4: #{gcn_forward.2} parent=1 // loop_header_branch
      %13 = sbr.rel (%p11) target = $region8
    $region5: #{gcn_forward.2} parent=1 // loop_body
      %s15 = ssub.s32 %s10, 1
      %s16 = ssub.s32 %s10, 2
      %s23 = sadd.s32 1, %s18
      %p24 = scmp.ge.s32.totalorder %s23, 2
      %s25 = scalar_select %p24, 0, %s23
      %s26 = sadd.s32 1, %s17
      %s27 = scalar_select %p24, %s26, %s17
      %p28 = scmp.ge.s32.totalorder %s27, 2
      %s29 = scalar_select %p28, 0, %s27
      %s30 = ssub.s32 %s17, %s29
      %s31 = ssub.s32 %s18, %s25
      %s32 = sor.u32 %s30, %s31
      %p33 = scmp.eq.s32.totalorder %s32, 0
      %s35 = sadd.s32 %s34, 1
      %s36 = scalar_select %p33, %s34, %s35
      %p39 = pneg %p33
      %p40 = scmp.eq.s32.totalorder %s10, 3
      %p41 = por %p39, %p40
      %p42 = scmp.ne.s32.totalorder %s34, %s37
      %p43 = scmp.eq.s32.totalorder %s10, 0
      %p44 = por %p42, %p43
      %p45 = scmp.ne.s32.totalorder %s34, %s37
      %p46 = scmp.eq.s32.totalorder %s15, 3
      %p47 = por %p45, %p46
      %p48 = scmp.ne.s32.totalorder %s37, %s38
      %p49 = scmp.eq.s32.totalorder %s15, 0
      %p50 = por %p48, %p49
      %p51 = scmp.ne.s32.totalorder %s37, %s38
      %p52 = scmp.eq.s32.totalorder %s16, 3
      %p53 = por %p51, %p52
      %p55 = scmp.ne.s32.totalorder %s38, %s54
      %p56 = scmp.eq.s32.totalorder %s16, 0
      %p57 = por %p55, %p56
      %s58 = ssub.s32 %s18, %s25
      %p59 = scmp.eq.s32.totalorder %s58, 0
      %s61 = sadd.s32 %s60, 1
      %s62 = scalar_select %p59, %s60, %s61
      %p65 = pneg %p59
      %p66 = scmp.eq.s32.totalorder %s10, 3
      %p67 = por %p65, %p66
      %p68 = scmp.ne.s32.totalorder %s60, %s63
      %p69 = scmp.eq.s32.totalorder %s10, 0
      %p70 = por %p68, %p69
      %p71 = scmp.ne.s32.totalorder %s60, %s63
      %p72 = scmp.eq.s32.totalorder %s15, 3
      %p73 = por %p71, %p72
      %p74 = scmp.ne.s32.totalorder %s63, %s64
      %p75 = scmp.eq.s32.totalorder %s15, 0
      %p76 = por %p74, %p75
      %p77 = scmp.ne.s32.totalorder %s63, %s64
      %p78 = scmp.eq.s32.totalorder %s16, 3
      %p79 = por %p77, %p78
      %p81 = scmp.ne.s32.totalorder %s64, %s80
      %p82 = scmp.eq.s32.totalorder %s16, 0
      %p83 = por %p81, %p82
      %s85 = sadd.s32 %s84, 1
      %p88 = scmp.eq.s32.totalorder %s10, 3
      %p89 = scmp.ne.s32.totalorder %s84, %s86
      %p90 = scmp.eq.s32.totalorder %s10, 0
      %p91 = por %p89, %p90
      %p92 = scmp.ne.s32.totalorder %s84, %s86
      %p93 = scmp.eq.s32.totalorder %s15, 3
      %p94 = por %p92, %p93
      %p95 = scmp.ne.s32.totalorder %s86, %s87
      %p96 = scmp.eq.s32.totalorder %s15, 0
      %p97 = por %p95, %p96
      %p98 = scmp.ne.s32.totalorder %s86, %s87
      %p99 = scmp.eq.s32.totalorder %s16, 3
      %p100 = por %p98, %p99
      %p102 = scmp.ne.s32.totalorder %s87, %s101
      %p103 = scmp.eq.s32.totalorder %s16, 0
      %p104 = por %p102, %p103
      %s106 = sadd.s32 %s105, 1
      %p109 = scmp.eq.s32.totalorder %s10, 3
      %p110 = scmp.ne.s32.totalorder %s105, %s107
      %p111 = scmp.eq.s32.totalorder %s10, 0
      %p112 = por %p110, %p111
      %p113 = scmp.ne.s32.totalorder %s105, %s107
      %p114 = scmp.eq.s32.totalorder %s15, 3
      %p115 = por %p113, %p114
      %p116 = scmp.ne.s32.totalorder %s107, %s108
      %p117 = scmp.eq.s32.totalorder %s15, 0
      %p118 = por %p116, %p117
      %p119 = scmp.ne.s32.totalorder %s107, %s108
      %p120 = scmp.eq.s32.totalorder %s16, 3
      %p121 = por %p119, %p120
      %p123 = scmp.ne.s32.totalorder %s108, %s122
      %p124 = scmp.eq.s32.totalorder %s16, 0
      %p125 = por %p123, %p124
      %s126 = ssub.s32 %s17, %s29
      %p127 = scmp.eq.s32.totalorder %s126, 0
      %s129 = sadd.s32 %s128, 1
      %s130 = scalar_select %p127, %s128, %s129
      %p133 = pneg %p127
      %p134 = scmp.eq.s32.totalorder %s10, 3
      %p135 = por %p133, %p134
      %p136 = scmp.ne.s32.totalorder %s128, %s131
      %p137 = scmp.eq.s32.totalorder %s10, 0
      %p138 = por %p136, %p137
      %p139 = scmp.ne.s32.totalorder %s128, %s131
      %p140 = scmp.eq.s32.totalorder %s15, 3
      %p141 = por %p139, %p140
      %p142 = scmp.ne.s32.totalorder %s131, %s132
      %p143 = scmp.eq.s32.totalorder %s15, 0
      %p144 = por %p142, %p143
      %p145 = scmp.ne.s32.totalorder %s131, %s132
      %p146 = scmp.eq.s32.totalorder %s16, 3
      %p147 = por %p145, %p146
      %p149 = scmp.ne.s32.totalorder %s132, %s148
      %p150 = scmp.eq.s32.totalorder %s16, 0
      %p151 = por %p149, %p150
      %p152 = scmp.le.s32.totalorder 1, %s10
      %p153 = scmp.lt.s32.totalorder %s10, 5
      %p154 = pnand %p152, %p153
      %p155 = pneg %p154
      // Predicated region
      $region9: #{gcn_forward.2} parent=5 // pred_check
        _
      $region10: #{gcn_forward.2} parent=5 // pred_check_branch
        %157 = sbr.rel (%p154) target = $region12
      $region11: #{gcn_forward.2} parent=5 // pred_region
        %s158 = ssub.s32 %s10, 1
        // Predicated region
        $region13: #{gcn_forward.2} parent=11 // pred_check
          %p159 = pneg %p97
        $region14: #{gcn_forward.2} parent=11 // pred_check_branch
          %161 = sbr.rel (%p159) target = $region16
        $region15: #{gcn_forward.2} parent=11 // pred_region
          _
        $region16: #{gcn_forward.2} parent=11 // pred_fallthru
          _
        // Predicated region
        $region17: #{gcn_forward.2} parent=11 // pred_check
          %p162 = pneg %p118
        $region18: #{gcn_forward.2} parent=11 // pred_check_branch
          %164 = sbr.rel (%p162) target = $region20
        $region19: #{gcn_forward.2} parent=11 // pred_region
          _
        $region20: #{gcn_forward.2} parent=11 // pred_fallthru
          _
      $region12: #{gcn_forward.2} parent=5 // pred_fallthru
        _
      %p165 = scmp.lt.s32.totalorder %s10, 4
      // Predicated region
      $region21: #{gcn_forward.2} parent=5 // pred_check
        %p166 = pneg %p165
      $region22: #{gcn_forward.2} parent=5 // pred_check_branch
        %168 = sbr.rel (%p166) target = $region24
      $region23: #{gcn_forward.2} parent=5 // pred_region
        // Predicated region
        $region25: #{gcn_forward.2} parent=23 // pred_check
          %p169 = pneg %p44
        $region26: #{gcn_forward.2} parent=23 // pred_check_branch
          %171 = sbr.rel (%p169) target = $region28
        $region27: #{gcn_forward.2} parent=23 // pred_region
          %s172 = sand.u32 %s34, 1
          %s173 = sand.u32 %s34, 1
          %s174 = smul.addr %s173, 256
          %s175 = scalar_lea.vmem [#allocation3], %s174
          %s176 = smul.u32 32, %s17
          %s177 = smul.u32 2, %s18
          %s178 = smul.addr %s176, 4
          %s179 = sadd.s32 %s177, %s178
          %s180 = smul.addr %s179, 4
          %s181 = scalar_lea.vmem %s0, %s180
          // Predicated region
          $region29: #{gcn_forward.2} parent=27 // pred_check
            _
          $region30: #{gcn_forward.2} parent=27 // pred_check_branch
            %183 = sbr.rel (0) target = $region32
          $region31: #{gcn_forward.2} parent=27 // pred_region
            // Predicated region
            $region33: #{gcn_forward.2} parent=31 // pred_check
              _
            $region34: #{gcn_forward.2} parent=31 // pred_check_branch
              %185 = sbr.rel (0) target = $region36
            $region35: #{gcn_forward.2} parent=31 // pred_region
              // Predicated region
              $region48: #{gcn_forward.2} parent=35 // pred_check
                _
              $region49: #{gcn_forward.2} parent=35 // pred_check_branch
                %263 = sbr.rel (0) target = $region51
              $region50: #{gcn_forward.2} parent=35 // pred_region
                loop: start=0, step=1, limit=1
                $region52: #{gcn_forward.2} parent=50 // loop_pre_header
                  _
                $region53: #{gcn_forward.2} parent=50 // loop_header
                  %s265 = sphi 0, %s269
                  %p266 = scmp.ge.s32.totalorder %s265, 1
                  %s270 = sphi %s181, %s181
                  %s271 = sphi %s175, %s175
                $region54: #{gcn_forward.2} parent=50 // loop_header_branch
                  %268 = sbr.rel (%p266) target = $region58
                $region55: #{gcn_forward.2} parent=50 // loop_body
                  %v272 = vld [vmem:[%s270] sm:$0xff]
                  %273 = vst [vmem:[%s271] sm:$0xff] %v272
                  %v274 = vld [vmem:[%s270 + $0x10] sm:$0xff]
                  %275 = vst [vmem:[%s271 + $0x8] sm:$0xff] %v274
                  %v276 = vld [vmem:[%s270 + $0x20] sm:$0xff]
                  %277 = vst [vmem:[%s271 + $0x10] sm:$0xff] %v276
                  %v278 = vld [vmem:[%s270 + $0x30] sm:$0xff]
                  %279 = vst [vmem:[%s271 + $0x18] sm:$0xff] %v278
                  %v280 = vld [vmem:[%s270 + $0x40] sm:$0xff]
                  %281 = vst [vmem:[%s271 + $0x20] sm:$0xff] %v280
                  %v282 = vld [vmem:[%s270 + $0x50] sm:$0xff]
                  %283 = vst [vmem:[%s271 + $0x28] sm:$0xff] %v282
                  %v284 = vld [vmem:[%s270 + $0x60] sm:$0xff]
                  %285 = vst [vmem:[%s271 + $0x30] sm:$0xff] %v284
                  %v286 = vld [vmem:[%s270 + $0x70] sm:$0xff]
                  %287 = vst [vmem:[%s271 + $0x38] sm:$0xff] %v286
                  %v288 = vld [vmem:[%s270 + $0x80] sm:$0xff]
                  %289 = vst [vmem:[%s271 + $0x40] sm:$0xff] %v288
                  %v290 = vld [vmem:[%s270 + $0x90] sm:$0xff]
                  %291 = vst [vmem:[%s271 + $0x48] sm:$0xff] %v290
                  %v292 = vld [vmem:[%s270 + $0xa0] sm:$0xff]
                  %293 = vst [vmem:[%s271 + $0x50] sm:$0xff] %v292
                  %v294 = vld [vmem:[%s270 + $0xb0] sm:$0xff]
                  %295 = vst [vmem:[%s271 + $0x58] sm:$0xff] %v294
                  %v296 = vld [vmem:[%s270 + $0xc0] sm:$0xff]
                  %297 = vst [vmem:[%s271 + $0x60] sm:$0xff] %v296
                  %v298 = vld [vmem:[%s270 + $0xd0] sm:$0xff]
                  %299 = vst [vmem:[%s271 + $0x68] sm:$0xff] %v298
                  %v300 = vld [vmem:[%s270 + $0xe0] sm:$0xff]
                  %301 = vst [vmem:[%s271 + $0x70] sm:$0xff] %v300
                  %v302 = vld [vmem:[%s270 + $0xf0] sm:$0xff]
                  %303 = vst [vmem:[%s271 + $0x78] sm:$0xff] %v302
                  %v304 = vld [vmem:[%s270 + $0x100] sm:$0xff]
                  %305 = vst [vmem:[%s271 + $0x80] sm:$0xff] %v304
                  %v306 = vld [vmem:[%s270 + $0x110] sm:$0xff]
                  %307 = vst [vmem:[%s271 + $0x88] sm:$0xff] %v306
                  %v308 = vld [vmem:[%s270 + $0x120] sm:$0xff]
                  %309 = vst [vmem:[%s271 + $0x90] sm:$0xff] %v308
                  %v310 = vld [vmem:[%s270 + $0x130] sm:$0xff]
                  %311 = vst [vmem:[%s271 + $0x98] sm:$0xff] %v310
                  %v312 = vld [vmem:[%s270 + $0x140] sm:$0xff]
                  %313 = vst [vmem:[%s271 + $0xa0] sm:$0xff] %v312
                  %v314 = vld [vmem:[%s270 + $0x150] sm:$0xff]
                  %315 = vst [vmem:[%s271 + $0xa8] sm:$0xff] %v314
                  %v316 = vld [vmem:[%s270 + $0x160] sm:$0xff]
                  %317 = vst [vmem:[%s271 + $0xb0] sm:$0xff] %v316
                  %v318 = vld [vmem:[%s270 + $0x170] sm:$0xff]
                  %319 = vst [vmem:[%s271 + $0xb8] sm:$0xff] %v318
                  %v320 = vld [vmem:[%s270 + $0x180] sm:$0xff]
                  %321 = vst [vmem:[%s271 + $0xc0] sm:$0xff] %v320
                  %v322 = vld [vmem:[%s270 + $0x190] sm:$0xff]
                  %323 = vst [vmem:[%s271 + $0xc8] sm:$0xff] %v322
                  %v324 = vld [vmem:[%s270 + $0x1a0] sm:$0xff]
                  %325 = vst [vmem:[%s271 + $0xd0] sm:$0xff] %v324
                  %v326 = vld [vmem:[%s270 + $0x1b0] sm:$0xff]
                  %327 = vst [vmem:[%s271 + $0xd8] sm:$0xff] %v326
                  %v328 = vld [vmem:[%s270 + $0x1c0] sm:$0xff]
                  %329 = vst [vmem:[%s271 + $0xe0] sm:$0xff] %v328
                  %v330 = vld [vmem:[%s270 + $0x1d0] sm:$0xff]
                  %331 = vst [vmem:[%s271 + $0xe8] sm:$0xff] %v330
                  %v332 = vld [vmem:[%s270 + $0x1e0] sm:$0xff]
                  %333 = vst [vmem:[%s271 + $0xf0] sm:$0xff] %v332
                  %v334 = vld [vmem:[%s270 + $0x1f0] sm:$0xff]
                  %335 = vst [vmem:[%s271 + $0xf8] sm:$0xff] %v334
                $region56: #{gcn_forward.2} parent=50 // loop_footer
                  %s269 = sadd.s32 1, %s265
                $region57: #{gcn_forward.2} parent=50 // loop_footer_branch
                  %264 = sbr.rel target = $region53
                $region58: #{gcn_forward.2} parent=50 // loop_exit
                  _
              $region51: #{gcn_forward.2} parent=35 // pred_fallthru
                _
              // Predicated region
              $region59: #{gcn_forward.2} parent=35 // pred_check
                _
              $region60: #{gcn_forward.2} parent=35 // pred_check_branch
                %337 = sbr.rel target = $region62
              $region61: #{gcn_forward.2} parent=35 // pred_region
                _
              $region62: #{gcn_forward.2} parent=35 // pred_fallthru
                _
            $region36: #{gcn_forward.2} parent=31 // pred_fallthru
              _
            // Predicated region
            $region37: #{gcn_forward.2} parent=31 // pred_check
              _
            $region38: #{gcn_forward.2} parent=31 // pred_check_branch
              %187 = sbr.rel target = $region40
            $region39: #{gcn_forward.2} parent=31 // pred_region
              %s189 = ssub.s32 256, 1
              loop: start=0, step=1, limit=1
              $region41: #{gcn_forward.2} parent=39 // loop_pre_header
                _
              $region42: #{gcn_forward.2} parent=39 // loop_header
                %s191 = sphi 0, %s195
                %p192 = scmp.ge.s32.totalorder %s191, 1
                %s196 = sphi %s181, %s181
                %s197 = sphi %s175, %s175
              $region43: #{gcn_forward.2} parent=39 // loop_header_branch
                %194 = sbr.rel (%p192) target = $region47
              $region44: #{gcn_forward.2} parent=39 // loop_body
                %v198 = vld [vmem:[%s196] sm:%s189]
                %199 = vst [vmem:[%s197] sm:%s189] %v198
                %v200 = vld [vmem:[%s196 + $0x10] sm:%s189]
                %201 = vst [vmem:[%s197 + $0x8] sm:%s189] %v200
                %v202 = vld [vmem:[%s196 + $0x20] sm:%s189]
                %203 = vst [vmem:[%s197 + $0x10] sm:%s189] %v202
                %v204 = vld [vmem:[%s196 + $0x30] sm:%s189]
                %205 = vst [vmem:[%s197 + $0x18] sm:%s189] %v204
                %v206 = vld [vmem:[%s196 + $0x40] sm:%s189]
                %207 = vst [vmem:[%s197 + $0x20] sm:%s189] %v206
                %v208 = vld [vmem:[%s196 + $0x50] sm:%s189]
                %209 = vst [vmem:[%s197 + $0x28] sm:%s189] %v208
                %v210 = vld [vmem:[%s196 + $0x60] sm:%s189]
                %211 = vst [vmem:[%s197 + $0x30] sm:%s189] %v210
                %v212 = vld [vmem:[%s196 + $0x70] sm:%s189]
                %213 = vst [vmem:[%s197 + $0x38] sm:%s189] %v212
                %v214 = vld [vmem:[%s196 + $0x80] sm:%s189]
                %215 = vst [vmem:[%s197 + $0x40] sm:%s189] %v214
                %v216 = vld [vmem:[%s196 + $0x90] sm:%s189]
                %217 = vst [vmem:[%s197 + $0x48] sm:%s189] %v216
                %v218 = vld [vmem:[%s196 + $0xa0] sm:%s189]
                %219 = vst [vmem:[%s197 + $0x50] sm:%s189] %v218
                %v220 = vld [vmem:[%s196 + $0xb0] sm:%s189]
                %221 = vst [vmem:[%s197 + $0x58] sm:%s189] %v220
                %v222 = vld [vmem:[%s196 + $0xc0] sm:%s189]
                %223 = vst [vmem:[%s197 + $0x60] sm:%s189] %v222
                %v224 = vld [vmem:[%s196 + $0xd0] sm:%s189]
                %225 = vst [vmem:[%s197 + $0x68] sm:%s189] %v224
                %v226 = vld [vmem:[%s196 + $0xe0] sm:%s189]
                %227 = vst [vmem:[%s197 + $0x70] sm:%s189] %v226
                %v228 = vld [vmem:[%s196 + $0xf0] sm:%s189]
                %229 = vst [vmem:[%s197 + $0x78] sm:%s189] %v228
                %v230 = vld [vmem:[%s196 + $0x100] sm:%s189]
                %231 = vst [vmem:[%s197 + $0x80] sm:%s189] %v230
                %v232 = vld [vmem:[%s196 + $0x110] sm:%s189]
                %233 = vst [vmem:[%s197 + $0x88] sm:%s189] %v232
                %v234 = vld [vmem:[%s196 + $0x120] sm:%s189]
                %235 = vst [vmem:[%s197 + $0x90] sm:%s189] %v234
                %v236 = vld [vmem:[%s196 + $0x130] sm:%s189]
                %237 = vst [vmem:[%s197 + $0x98] sm:%s189] %v236
                %v238 = vld [vmem:[%s196 + $0x140] sm:%s189]
                %239 = vst [vmem:[%s197 + $0xa0] sm:%s189] %v238
                %v240 = vld [vmem:[%s196 + $0x150] sm:%s189]
                %241 = vst [vmem:[%s197 + $0xa8] sm:%s189] %v240
                %v242 = vld [vmem:[%s196 + $0x160] sm:%s189]
                %243 = vst [vmem:[%s197 + $0xb0] sm:%s189] %v242
                %v244 = vld [vmem:[%s196 + $0x170] sm:%s189]
                %245 = vst [vmem:[%s197 + $0xb8] sm:%s189] %v244
                %v246 = vld [vmem:[%s196 + $0x180] sm:%s189]
                %247 = vst [vmem:[%s197 + $0xc0] sm:%s189] %v246
                %v248 = vld [vmem:[%s196 + $0x190] sm:%s189]
                %249 = vst [vmem:[%s197 + $0xc8] sm:%s189] %v248
                %v250 = vld [vmem:[%s196 + $0x1a0] sm:%s189]
                %251 = vst [vmem:[%s197 + $0xd0] sm:%s189] %v250
                %v252 = vld [vmem:[%s196 + $0x1b0] sm:%s189]
                %253 = vst [vmem:[%s197 + $0xd8] sm:%s189] %v252
                %v254 = vld [vmem:[%s196 + $0x1c0] sm:%s189]
                %255 = vst [vmem:[%s197 + $0xe0] sm:%s189] %v254
                %v256 = vld [vmem:[%s196 + $0x1d0] sm:%s189]
                %257 = vst [vmem:[%s197 + $0xe8] sm:%s189] %v256
                %v258 = vld [vmem:[%s196 + $0x1e0] sm:%s189]
                %259 = vst [vmem:[%s197 + $0xf0] sm:%s189] %v258
                %v260 = vld [vmem:[%s196 + $0x1f0] sm:%s189]
                %261 = vst [vmem:[%s197 + $0xf8] sm:%s189] %v260
              $region45: #{gcn_forward.2} parent=39 // loop_footer
                %s195 = sadd.s32 1, %s191
              $region46: #{gcn_forward.2} parent=39 // loop_footer_branch
                %190 = sbr.rel target = $region42
              $region47: #{gcn_forward.2} parent=39 // loop_exit
                _
            $region40: #{gcn_forward.2} parent=31 // pred_fallthru
              _
          $region32: #{gcn_forward.2} parent=27 // pred_fallthru
            _
          %338 = vnop
        $region28: #{gcn_forward.2} parent=23 // pred_fallthru
          _
        // Predicated region
        $region63: #{gcn_forward.2} parent=23 // pred_check
          %p339 = pneg %p70
        $region64: #{gcn_forward.2} parent=23 // pred_check_branch
          %341 = sbr.rel (%p339) target = $region66
        $region65: #{gcn_forward.2} parent=23 // pred_region
          %s342 = smul.u32 32, %s18
          %p343 = scmp.lt.s32.totalorder %s342, 63
          %s344 = scalar_select %p343, %s342, 63
          %s345 = smul.addr %s344, 4
          %s346 = scalar_lea.vmem %s1, %s345
          %s347 = smul.u32 32, %s18
        $region66: #{gcn_forward.2} parent=23 // pred_fallthru
          _
      $region24: #{gcn_forward.2} parent=5 // pred_fallthru
        _
      %p348 = scmp.le.s32.totalorder 1, %s10
      %p349 = scmp.lt.s32.totalorder %s10, 5
      %p350 = pnand %p348, %p349
      %p351 = pneg %p350
      // Predicated region
      $region67: #{gcn_forward.2} parent=5 // pred_check
        _
      $region68: #{gcn_forward.2} parent=5 // pred_check_branch
        %353 = sbr.rel (%p350) target = $region70
      $region69: #{gcn_forward.2} parent=5 // pred_region
        %s354 = ssub.s32 %s10, 1
        %s355 = sand.u32 %s37, 1
        %s356 = sand.u32 %s37, 1
        %s357 = smul.addr %s356, 256
        %s358 = scalar_lea.vmem [#allocation3], %s357
        // Predicated region
        $region71: #{gcn_forward.2} parent=69 // pred_check
          %p359 = pneg %p50
        $region72: #{gcn_forward.2} parent=69 // pred_check_branch
          %361 = sbr.rel (%p359) target = $region74
        $region73: #{gcn_forward.2} parent=69 // pred_region
          _
        $region74: #{gcn_forward.2} parent=69 // pred_fallthru
          _
        %s362 = sand.u32 %s37, 1
        %s363 = sand.u32 %s37, 1
        %s364 = smul.addr %s363, 256
        %s365 = scalar_lea.vmem [#allocation3], %s364
        %p366 = pneg %p50
        %p367 = pneg %p47
        %s368 = smul.u32 32, %s20
        %p369 = scmp.lt.s32.totalorder %s368, 63
        %s370 = scalar_select %p369, %s368, 63
        %s371 = smul.addr %s370, 4
        %s372 = scalar_lea.vmem %s1, %s371
        %p373 = pneg %p76
        %p374 = pneg %p73
        %p375 = pneg %p97
        %p376 = pneg %p94
        %p377 = pneg %p118
        %p378 = pneg %p115
        %p379 = pneg %p144
        %p380 = pneg %p141
        %s381 = smul.u32 32, %s19
        %p382 = scmp.lt.s32.totalorder %s381, 63
        %s383 = scalar_select %p382, %s381, 63
        %s384 = smul.addr %s383, 4
        %s385 = scalar_lea.vmem %s4, %s384
        %s386 = smul.u32 32, %s19
        %s387 = smul.u32 2, %s20
        %s388 = smul.u32 32, %s20
        %p389 = scmp.lt.s32.totalorder %s388, 63
        %s390 = scalar_select %p389, %s388, 63
        %s391 = smul.addr %s390, 4
        %s392 = scalar_lea.vmem %s1, %s391
        %s393 = smul.u32 32, %s20
        %s394 = smul.u32 32, %s19
        %p395 = scmp.lt.s32.totalorder %s394, 63
        %s396 = scalar_select %p395, %s394, 63
        %s397 = smul.addr %s396, 4
        %s398 = scalar_lea.vmem %s4, %s397
        %s399 = smul.u32 32, %s19
        %p401 = scmp.eq.s32.totalorder %s20, 0
        // Predicated region
        $region75: #{gcn_forward.2} parent=69 // pred_check
          %p402 = pneg %p401
        $region76: #{gcn_forward.2} parent=69 // pred_check_branch
          %404 = sbr.rel (%p402) target = $region78
        $region77: #{gcn_forward.2} parent=69 // pred_region
          %405 = vst [vmem:[#allocation2] sm:$0xff] 0.0
          %406 = vst [vmem:[#allocation2 + $0x8] sm:$0xff] 0.0
          %407 = vst [vmem:[#allocation2 + $0x10] sm:$0xff] 0.0
          %408 = vst [vmem:[#allocation2 + $0x18] sm:$0xff] 0.0
          %409 = vst [vmem:[#allocation2 + $0x20] sm:$0xff] 0.0
          %410 = vst [vmem:[#allocation2 + $0x28] sm:$0xff] 0.0
          %411 = vst [vmem:[#allocation2 + $0x30] sm:$0xff] 0.0
          %412 = vst [vmem:[#allocation2 + $0x38] sm:$0xff] 0.0
          %413 = vst [vmem:[#allocation2 + $0x40] sm:$0xff] 0.0
          %414 = vst [vmem:[#allocation2 + $0x48] sm:$0xff] 0.0
          %415 = vst [vmem:[#allocation2 + $0x50] sm:$0xff] 0.0
          %416 = vst [vmem:[#allocation2 + $0x58] sm:$0xff] 0.0
          %417 = vst [vmem:[#allocation2 + $0x60] sm:$0xff] 0.0
          %418 = vst [vmem:[#allocation2 + $0x68] sm:$0xff] 0.0
          %419 = vst [vmem:[#allocation2 + $0x70] sm:$0xff] 0.0
          %420 = vst [vmem:[#allocation2 + $0x78] sm:$0xff] 0.0
          %421 = vst [vmem:[#allocation2 + $0x80] sm:$0xff] 0.0
          %422 = vst [vmem:[#allocation2 + $0x88] sm:$0xff] 0.0
          %423 = vst [vmem:[#allocation2 + $0x90] sm:$0xff] 0.0
          %424 = vst [vmem:[#allocation2 + $0x98] sm:$0xff] 0.0
          %425 = vst [vmem:[#allocation2 + $0xa0] sm:$0xff] 0.0
          %426 = vst [vmem:[#allocation2 + $0xa8] sm:$0xff] 0.0
          %427 = vst [vmem:[#allocation2 + $0xb0] sm:$0xff] 0.0
          %428 = vst [vmem:[#allocation2 + $0xb8] sm:$0xff] 0.0
          %429 = vst [vmem:[#allocation2 + $0xc0] sm:$0xff] 0.0
          %430 = vst [vmem:[#allocation2 + $0xc8] sm:$0xff] 0.0
          %431 = vst [vmem:[#allocation2 + $0xd0] sm:$0xff] 0.0
          %432 = vst [vmem:[#allocation2 + $0xd8] sm:$0xff] 0.0
          %433 = vst [vmem:[#allocation2 + $0xe0] sm:$0xff] 0.0
          %434 = vst [vmem:[#allocation2 + $0xe8] sm:$0xff] 0.0
          %435 = vst [vmem:[#allocation2 + $0xf0] sm:$0xff] 0.0
          %436 = vst [vmem:[#allocation2 + $0xf8] sm:$0xff] 0.0
        $region78: #{gcn_forward.2} parent=69 // pred_fallthru
          _
        %v437 = vld [vmem:[%s392] sm:$0xf]
        %v438 = vld [vmem:[%s392 + $0x4] sm:$0xf]
        %v439 = vld [vmem:[%s392 + $0x8] sm:$0xf]
        %v440 = vld [vmem:[%s392 + $0xc] sm:$0xf]
        %v441 = vld [vmem:[%s392 + $0x10] sm:$0xf]
        %v442 = vld [vmem:[%s392 + $0x14] sm:$0xf]
        %v443 = vld [vmem:[%s392 + $0x18] sm:$0xf]
        %v444 = vld [vmem:[%s392 + $0x1c] sm:$0xf]
        %v445 = vld [vmem:[%s392 + $0x20] sm:$0xf]
        %v446 = vld [vmem:[%s392 + $0x24] sm:$0xf]
        %v447 = vld [vmem:[%s392 + $0x28] sm:$0xf]
        %v448 = vld [vmem:[%s392 + $0x2c] sm:$0xf]
        %v449 = vld [vmem:[%s392 + $0x30] sm:$0xf]
        %v450 = vld [vmem:[%s392 + $0x34] sm:$0xf]
        %v451 = vld [vmem:[%s392 + $0x38] sm:$0xf]
        %v452 = vld [vmem:[%s392 + $0x3c] sm:$0xf]
        %v453 = vld [vmem:[%s392 + $0x40] sm:$0xf]
        %v454 = vld [vmem:[%s392 + $0x44] sm:$0xf]
        %v455 = vld [vmem:[%s392 + $0x48] sm:$0xf]
        %v456 = vld [vmem:[%s392 + $0x4c] sm:$0xf]
        %v457 = vld [vmem:[%s392 + $0x50] sm:$0xf]
        %v458 = vld [vmem:[%s392 + $0x54] sm:$0xf]
        %v459 = vld [vmem:[%s392 + $0x58] sm:$0xf]
        %v460 = vld [vmem:[%s392 + $0x5c] sm:$0xf]
        %v461 = vld [vmem:[%s392 + $0x60] sm:$0xf]
        %v462 = vld [vmem:[%s392 + $0x64] sm:$0xf]
        %v463 = vld [vmem:[%s392 + $0x68] sm:$0xf]
        %v464 = vld [vmem:[%s392 + $0x6c] sm:$0xf]
        %v465 = vld [vmem:[%s392 + $0x70] sm:$0xf]
        %v466 = vld [vmem:[%s392 + $0x74] sm:$0xf]
        %v467 = vld [vmem:[%s392 + $0x78] sm:$0xf]
        %v468 = vld [vmem:[%s392 + $0x7c] sm:$0xf]
        %v469 = vld [vmem:[%s2] sm:$0xf]
        %v470 = vld [vmem:[%s2 + $0x4] sm:$0xf]
        %v503 = vunpack.c.l.b16 %v437
        %v504 = vunpack.c.l.b16 %v438
        %v505 = vunpack.c.l.b16 %v439
        %v506 = vunpack.c.l.b16 %v440
        %v507 = vunpack.c.l.b16 %v441
        %v508 = vunpack.c.l.b16 %v442
        %v509 = vunpack.c.l.b16 %v443
        %v510 = vunpack.c.l.b16 %v444
        %v511 = vunpack.c.l.b16 %v445
        %v512 = vunpack.c.l.b16 %v446
        %v513 = vunpack.c.l.b16 %v447
        %v514 = vunpack.c.l.b16 %v448
        %v515 = vunpack.c.l.b16 %v449
        %v516 = vunpack.c.l.b16 %v450
        %v517 = vunpack.c.l.b16 %v451
        %v518 = vunpack.c.l.b16 %v452
        %v519 = vunpack.c.l.b16 %v453
        %v520 = vunpack.c.l.b16 %v454
        %v521 = vunpack.c.l.b16 %v455
        %v522 = vunpack.c.l.b16 %v456
        %v523 = vunpack.c.l.b16 %v457
        %v524 = vunpack.c.l.b16 %v458
        %v525 = vunpack.c.l.b16 %v459
        %v526 = vunpack.c.l.b16 %v460
        %v527 = vunpack.c.l.b16 %v461
        %v528 = vunpack.c.l.b16 %v462
        %v529 = vunpack.c.l.b16 %v463
        %v530 = vunpack.c.l.b16 %v464
        %v531 = vunpack.c.l.b16 %v465
        %v532 = vunpack.c.l.b16 %v466
        %v533 = vunpack.c.l.b16 %v467
        %v534 = vunpack.c.l.b16 %v468
        %v535 = vpack.c.b16 %v504, %v503
        %v536 = vpack.c.b16 %v506, %v505
        %v537 = vpack.c.b16 %v508, %v507
        %v538 = vpack.c.b16 %v510, %v509
        %v539 = vpack.c.b16 %v512, %v511
        %v540 = vpack.c.b16 %v514, %v513
        %v541 = vpack.c.b16 %v516, %v515
        %v542 = vpack.c.b16 %v518, %v517
        %v543 = vpack.c.b16 %v520, %v519
        %v544 = vpack.c.b16 %v522, %v521
        %v545 = vpack.c.b16 %v524, %v523
        %v546 = vpack.c.b16 %v526, %v525
        %v547 = vpack.c.b16 %v528, %v527
        %v548 = vpack.c.b16 %v530, %v529
        %v549 = vpack.c.b16 %v532, %v531
        %v550 = vpack.c.b16 %v534, %v533
        %v553 = vunpack.c.l.b16 %v469
        %v554 = vunpack.c.l.b16 %v470
        %v555 = vpack.c.b16 %v554, %v553
        %vm557 = vcmask 130048
        %v559 = vsel %vm557, %v535, 0
        %v562 = vsel %vm557, %v536, 0
        %v565 = vsel %vm557, %v537, 0
        %v568 = vsel %vm557, %v538, 0
        %v571 = vsel %vm557, %v539, 0
        %v574 = vsel %vm557, %v540, 0
        %v577 = vsel %vm557, %v541, 0
        %v580 = vsel %vm557, %v542, 0
        %v583 = vsel %vm557, %v543, 0
        %v586 = vsel %vm557, %v544, 0
        %v589 = vsel %vm557, %v545, 0
        %v592 = vsel %vm557, %v546, 0
        %v595 = vsel %vm557, %v547, 0
        %v598 = vsel %vm557, %v548, 0
        %v601 = vsel %vm557, %v549, 0
        %v604 = vsel %vm557, %v550, 0
        %606 = vmatpush.bf16.msra.mxu0 0
        %607 = vmatpush.bf16.msra.mxu0 0
        %608 = vmatpush.bf16.msra.mxu0 0
        %609 = vmatpush.bf16.msra.mxu0 0
        %610 = vmatpush.bf16.msra.mxu0 0
        %611 = vmatpush.bf16.msra.mxu0 0
        %612 = vmatpush.bf16.msra.mxu0 0
        %613 = vmatpush.bf16.msra.mxu0 %v555
        %614 = vmatmul.bf16.gmra.mxu0 %v559
        %v615 = vpop.f32.mrf.mxu0
        %v616 = vadd.f32 0.0, %v615
        %v617 = vpop.f32.mrf.mxu0
        %v618 = vadd.f32 0.0, %v617
        %619 = vmatmul.bf16.gmra.mxu0 %v562
        %v620 = vpop.f32.mrf.mxu0
        %v621 = vadd.f32 0.0, %v620
        %v622 = vpop.f32.mrf.mxu0
        %v623 = vadd.f32 0.0, %v622
        %624 = vmatmul.bf16.gmra.mxu0 %v565
        %v625 = vpop.f32.mrf.mxu0
        %v626 = vadd.f32 0.0, %v625
        %v627 = vpop.f32.mrf.mxu0
        %v628 = vadd.f32 0.0, %v627
        %629 = vmatmul.bf16.gmra.mxu0 %v568
        %v630 = vpop.f32.mrf.mxu0
        %v631 = vadd.f32 0.0, %v630
        %v632 = vpop.f32.mrf.mxu0
        %v633 = vadd.f32 0.0, %v632
        %634 = vmatmul.bf16.gmra.mxu0 %v571
        %v635 = vpop.f32.mrf.mxu0
        %v636 = vadd.f32 0.0, %v635
        %v637 = vpop.f32.mrf.mxu0
        %v638 = vadd.f32 0.0, %v637
        %639 = vmatmul.bf16.gmra.mxu0 %v574
        %v640 = vpop.f32.mrf.mxu0
        %v641 = vadd.f32 0.0, %v640
        %v642 = vpop.f32.mrf.mxu0
        %v643 = vadd.f32 0.0, %v642
        %644 = vmatmul.bf16.gmra.mxu0 %v577
        %v645 = vpop.f32.mrf.mxu0
        %v646 = vadd.f32 0.0, %v645
        %v647 = vpop.f32.mrf.mxu0
        %v648 = vadd.f32 0.0, %v647
        %649 = vmatmul.bf16.gmra.mxu0 %v580
        %v650 = vpop.f32.mrf.mxu0
        %v651 = vadd.f32 0.0, %v650
        %v652 = vpop.f32.mrf.mxu0
        %v653 = vadd.f32 0.0, %v652
        %654 = vmatmul.bf16.gmra.mxu0 %v583
        %v655 = vpop.f32.mrf.mxu0
        %v656 = vadd.f32 0.0, %v655
        %v657 = vpop.f32.mrf.mxu0
        %v658 = vadd.f32 0.0, %v657
        %659 = vmatmul.bf16.gmra.mxu0 %v586
        %v660 = vpop.f32.mrf.mxu0
        %v661 = vadd.f32 0.0, %v660
        %v662 = vpop.f32.mrf.mxu0
        %v663 = vadd.f32 0.0, %v662
        %664 = vmatmul.bf16.gmra.mxu0 %v589
        %v665 = vpop.f32.mrf.mxu0
        %v666 = vadd.f32 0.0, %v665
        %v667 = vpop.f32.mrf.mxu0
        %v668 = vadd.f32 0.0, %v667
        %669 = vmatmul.bf16.gmra.mxu0 %v592
        %v670 = vpop.f32.mrf.mxu0
        %v671 = vadd.f32 0.0, %v670
        %v672 = vpop.f32.mrf.mxu0
        %v673 = vadd.f32 0.0, %v672
        %674 = vmatmul.bf16.gmra.mxu0 %v595
        %v675 = vpop.f32.mrf.mxu0
        %v676 = vadd.f32 0.0, %v675
        %v677 = vpop.f32.mrf.mxu0
        %v678 = vadd.f32 0.0, %v677
        %679 = vmatmul.bf16.gmra.mxu0 %v598
        %v680 = vpop.f32.mrf.mxu0
        %v681 = vadd.f32 0.0, %v680
        %v682 = vpop.f32.mrf.mxu0
        %v683 = vadd.f32 0.0, %v682
        %684 = vmatmul.bf16.gmra.mxu0 %v601
        %v685 = vpop.f32.mrf.mxu0
        %v686 = vadd.f32 0.0, %v685
        %v687 = vpop.f32.mrf.mxu0
        %v688 = vadd.f32 0.0, %v687
        %689 = vmatmul.bf16.gmra.mxu0 %v604
        %v690 = vpop.f32.mrf.mxu0
        %v691 = vadd.f32 0.0, %v690
        %v692 = vpop.f32.mrf.mxu0
        %v693 = vadd.f32 0.0, %v692
        %694 = vdwg.mxu0
        %v695 = vpack.c.bf16 %v618, %v616
        %v696 = vpack.c.bf16 %v623, %v621
        %v697 = vpack.c.bf16 %v628, %v626
        %v698 = vpack.c.bf16 %v633, %v631
        %v699 = vpack.c.bf16 %v638, %v636
        %v700 = vpack.c.bf16 %v643, %v641
        %v701 = vpack.c.bf16 %v648, %v646
        %v702 = vpack.c.bf16 %v653, %v651
        %v703 = vpack.c.bf16 %v658, %v656
        %v704 = vpack.c.bf16 %v663, %v661
        %v705 = vpack.c.bf16 %v668, %v666
        %v706 = vpack.c.bf16 %v673, %v671
        %v707 = vpack.c.bf16 %v678, %v676
        %v708 = vpack.c.bf16 %v683, %v681
        %v709 = vpack.c.bf16 %v688, %v686
        %v710 = vpack.c.bf16 %v693, %v691
        %v711 = vld [vmem:[#allocation2] sm:$0xff]
        %v712 = vld [vmem:[#allocation2 + $0x8] sm:$0xff]
        %v713 = vld [vmem:[#allocation2 + $0x10] sm:$0xff]
        %v714 = vld [vmem:[#allocation2 + $0x18] sm:$0xff]
        %v715 = vld [vmem:[#allocation2 + $0x20] sm:$0xff]
        %v716 = vld [vmem:[#allocation2 + $0x28] sm:$0xff]
        %v717 = vld [vmem:[#allocation2 + $0x30] sm:$0xff]
        %v718 = vld [vmem:[#allocation2 + $0x38] sm:$0xff]
        %v719 = vld [vmem:[#allocation2 + $0x40] sm:$0xff]
        %v720 = vld [vmem:[#allocation2 + $0x48] sm:$0xff]
        %v721 = vld [vmem:[#allocation2 + $0x50] sm:$0xff]
        %v722 = vld [vmem:[#allocation2 + $0x58] sm:$0xff]
        %v723 = vld [vmem:[#allocation2 + $0x60] sm:$0xff]
        %v724 = vld [vmem:[#allocation2 + $0x68] sm:$0xff]
        %v725 = vld [vmem:[#allocation2 + $0x70] sm:$0xff]
        %v726 = vld [vmem:[#allocation2 + $0x78] sm:$0xff]
        %v727 = vld [vmem:[#allocation2 + $0x80] sm:$0xff]
        %v728 = vld [vmem:[#allocation2 + $0x88] sm:$0xff]
        %v729 = vld [vmem:[#allocation2 + $0x90] sm:$0xff]
        %v730 = vld [vmem:[#allocation2 + $0x98] sm:$0xff]
        %v731 = vld [vmem:[#allocation2 + $0xa0] sm:$0xff]
        %v732 = vld [vmem:[#allocation2 + $0xa8] sm:$0xff]
        %v733 = vld [vmem:[#allocation2 + $0xb0] sm:$0xff]
        %v734 = vld [vmem:[#allocation2 + $0xb8] sm:$0xff]
        %v735 = vld [vmem:[#allocation2 + $0xc0] sm:$0xff]
        %v736 = vld [vmem:[#allocation2 + $0xc8] sm:$0xff]
        %v737 = vld [vmem:[#allocation2 + $0xd0] sm:$0xff]
        %v738 = vld [vmem:[#allocation2 + $0xd8] sm:$0xff]
        %v739 = vld [vmem:[#allocation2 + $0xe0] sm:$0xff]
        %v740 = vld [vmem:[#allocation2 + $0xe8] sm:$0xff]
        %v741 = vld [vmem:[#allocation2 + $0xf0] sm:$0xff]
        %v742 = vld [vmem:[#allocation2 + $0xf8] sm:$0xff]
        %v743 = vld [vmem:[%s358] sm:$0xff]
        %v744 = vld [vmem:[%s358 + $0x8] sm:$0xff]
        %v745 = vld [vmem:[%s358 + $0x10] sm:$0xff]
        %v746 = vld [vmem:[%s358 + $0x18] sm:$0xff]
        %v747 = vld [vmem:[%s358 + $0x20] sm:$0xff]
        %v748 = vld [vmem:[%s358 + $0x28] sm:$0xff]
        %v749 = vld [vmem:[%s358 + $0x30] sm:$0xff]
        %v750 = vld [vmem:[%s358 + $0x38] sm:$0xff]
        %v751 = vld [vmem:[%s358 + $0x40] sm:$0xff]
        %v752 = vld [vmem:[%s358 + $0x48] sm:$0xff]
        %v753 = vld [vmem:[%s358 + $0x50] sm:$0xff]
        %v754 = vld [vmem:[%s358 + $0x58] sm:$0xff]
        %v755 = vld [vmem:[%s358 + $0x60] sm:$0xff]
        %v756 = vld [vmem:[%s358 + $0x68] sm:$0xff]
        %v757 = vld [vmem:[%s358 + $0x70] sm:$0xff]
        %v758 = vld [vmem:[%s358 + $0x78] sm:$0xff]
        %v759 = vld [vmem:[%s358 + $0x80] sm:$0xff]
        %v760 = vld [vmem:[%s358 + $0x88] sm:$0xff]
        %v761 = vld [vmem:[%s358 + $0x90] sm:$0xff]
        %v762 = vld [vmem:[%s358 + $0x98] sm:$0xff]
        %v763 = vld [vmem:[%s358 + $0xa0] sm:$0xff]
        %v764 = vld [vmem:[%s358 + $0xa8] sm:$0xff]
        %v765 = vld [vmem:[%s358 + $0xb0] sm:$0xff]
        %v766 = vld [vmem:[%s358 + $0xb8] sm:$0xff]
        %v767 = vld [vmem:[%s358 + $0xc0] sm:$0xff]
        %v768 = vld [vmem:[%s358 + $0xc8] sm:$0xff]
        %v769 = vld [vmem:[%s358 + $0xd0] sm:$0xff]
        %v770 = vld [vmem:[%s358 + $0xd8] sm:$0xff]
        %v771 = vld [vmem:[%s358 + $0xe0] sm:$0xff]
        %v772 = vld [vmem:[%s358 + $0xe8] sm:$0xff]
        %v773 = vld [vmem:[%s358 + $0xf0] sm:$0xff]
        %v774 = vld [vmem:[%s358 + $0xf8] sm:$0xff]
        %v807 = vunpack.c.l.b16 %v743
        %v808 = vunpack.c.h.b16 %v743
        %v809 = vunpack.c.l.b16 %v744
        %v810 = vunpack.c.h.b16 %v744
        %v811 = vunpack.c.l.b16 %v745
        %v812 = vunpack.c.h.b16 %v745
        %v813 = vunpack.c.l.b16 %v746
        %v814 = vunpack.c.h.b16 %v746
        %v815 = vunpack.c.l.b16 %v747
        %v816 = vunpack.c.h.b16 %v747
        %v817 = vunpack.c.l.b16 %v748
        %v818 = vunpack.c.h.b16 %v748
        %v819 = vunpack.c.l.b16 %v749
        %v820 = vunpack.c.h.b16 %v749
        %v821 = vunpack.c.l.b16 %v750
        %v822 = vunpack.c.h.b16 %v750
        %v823 = vunpack.c.l.b16 %v751
        %v824 = vunpack.c.h.b16 %v751
        %v825 = vunpack.c.l.b16 %v752
        %v826 = vunpack.c.h.b16 %v752
        %v827 = vunpack.c.l.b16 %v753
        %v828 = vunpack.c.h.b16 %v753
        %v829 = vunpack.c.l.b16 %v754
        %v830 = vunpack.c.h.b16 %v754
        %v831 = vunpack.c.l.b16 %v755
        %v832 = vunpack.c.h.b16 %v755
        %v833 = vunpack.c.l.b16 %v756
        %v834 = vunpack.c.h.b16 %v756
        %v835 = vunpack.c.l.b16 %v757
        %v836 = vunpack.c.h.b16 %v757
        %v837 = vunpack.c.l.b16 %v758
        %v838 = vunpack.c.h.b16 %v758
        %v839 = vunpack.c.l.b16 %v759
        %v840 = vunpack.c.h.b16 %v759
        %v841 = vunpack.c.l.b16 %v760
        %v842 = vunpack.c.h.b16 %v760
        %v843 = vunpack.c.l.b16 %v761
        %v844 = vunpack.c.h.b16 %v761
        %v845 = vunpack.c.l.b16 %v762
        %v846 = vunpack.c.h.b16 %v762
        %v847 = vunpack.c.l.b16 %v763
        %v848 = vunpack.c.h.b16 %v763
        %v849 = vunpack.c.l.b16 %v764
        %v850 = vunpack.c.h.b16 %v764
        %v851 = vunpack.c.l.b16 %v765
        %v852 = vunpack.c.h.b16 %v765
        %v853 = vunpack.c.l.b16 %v766
        %v854 = vunpack.c.h.b16 %v766
        %v855 = vunpack.c.l.b16 %v767
        %v856 = vunpack.c.h.b16 %v767
        %v857 = vunpack.c.l.b16 %v768
        %v858 = vunpack.c.h.b16 %v768
        %v859 = vunpack.c.l.b16 %v769
        %v860 = vunpack.c.h.b16 %v769
        %v861 = vunpack.c.l.b16 %v770
        %v862 = vunpack.c.h.b16 %v770
        %v863 = vunpack.c.l.b16 %v771
        %v864 = vunpack.c.h.b16 %v771
        %v865 = vunpack.c.l.b16 %v772
        %v866 = vunpack.c.h.b16 %v772
        %v867 = vunpack.c.l.b16 %v773
        %v868 = vunpack.c.h.b16 %v773
        %v869 = vunpack.c.l.b16 %v774
        %v870 = vunpack.c.h.b16 %v774
        %v871 = vpack.c.b16 %v809, %v807
        %v872 = vpack.c.b16 %v810, %v808
        %v873 = vpack.c.b16 %v813, %v811
        %v874 = vpack.c.b16 %v814, %v812
        %v875 = vpack.c.b16 %v817, %v815
        %v876 = vpack.c.b16 %v818, %v816
        %v877 = vpack.c.b16 %v821, %v819
        %v878 = vpack.c.b16 %v822, %v820
        %v879 = vpack.c.b16 %v825, %v823
        %v880 = vpack.c.b16 %v826, %v824
        %v881 = vpack.c.b16 %v829, %v827
        %v882 = vpack.c.b16 %v830, %v828
        %v883 = vpack.c.b16 %v833, %v831
        %v884 = vpack.c.b16 %v834, %v832
        %v885 = vpack.c.b16 %v837, %v835
        %v886 = vpack.c.b16 %v838, %v836
        %v887 = vpack.c.b16 %v841, %v839
        %v888 = vpack.c.b16 %v842, %v840
        %v889 = vpack.c.b16 %v845, %v843
        %v890 = vpack.c.b16 %v846, %v844
        %v891 = vpack.c.b16 %v849, %v847
        %v892 = vpack.c.b16 %v850, %v848
        %v893 = vpack.c.b16 %v853, %v851
        %v894 = vpack.c.b16 %v854, %v852
        %v895 = vpack.c.b16 %v857, %v855
        %v896 = vpack.c.b16 %v858, %v856
        %v897 = vpack.c.b16 %v861, %v859
        %v898 = vpack.c.b16 %v862, %v860
        %v899 = vpack.c.b16 %v865, %v863
        %v900 = vpack.c.b16 %v866, %v864
        %v901 = vpack.c.b16 %v869, %v867
        %v902 = vpack.c.b16 %v870, %v868
        %935 = vmatpush.bf16.msra.mxu0 %v702
        %936 = vmatpush.bf16.msra.mxu0 %v701
        %937 = vmatpush.bf16.msra.mxu0 %v700
        %938 = vmatpush.bf16.msra.mxu0 %v699
        %939 = vmatpush.bf16.msra.mxu0 %v698
        %940 = vmatpush.bf16.msra.mxu0 %v697
        %941 = vmatpush.bf16.msra.mxu0 %v696
        %942 = vmatpush.bf16.msra.mxu0 %v695
        %943 = vmatmul.bf16.gmra.mxu0 %v871
        %v944 = vpop.f32.mrf.mxu0
        %v945 = vadd.f32 0.0, %v944
        %v946 = vpop.f32.mrf.mxu0
        %v947 = vadd.f32 0.0, %v946
        %948 = vmatmul.bf16.gmra.mxu0 %v873
        %v949 = vpop.f32.mrf.mxu0
        %v950 = vadd.f32 0.0, %v949
        %v951 = vpop.f32.mrf.mxu0
        %v952 = vadd.f32 0.0, %v951
        %953 = vmatmul.bf16.gmra.mxu0 %v875
        %v954 = vpop.f32.mrf.mxu0
        %v955 = vadd.f32 0.0, %v954
        %v956 = vpop.f32.mrf.mxu0
        %v957 = vadd.f32 0.0, %v956
        %958 = vmatmul.bf16.gmra.mxu0 %v877
        %v959 = vpop.f32.mrf.mxu0
        %v960 = vadd.f32 0.0, %v959
        %v961 = vpop.f32.mrf.mxu0
        %v962 = vadd.f32 0.0, %v961
        %963 = vmatmul.bf16.gmra.mxu0 %v879
        %v964 = vpop.f32.mrf.mxu0
        %v965 = vadd.f32 0.0, %v964
        %v966 = vpop.f32.mrf.mxu0
        %v967 = vadd.f32 0.0, %v966
        %968 = vmatmul.bf16.gmra.mxu0 %v881
        %v969 = vpop.f32.mrf.mxu0
        %v970 = vadd.f32 0.0, %v969
        %v971 = vpop.f32.mrf.mxu0
        %v972 = vadd.f32 0.0, %v971
        %973 = vmatmul.bf16.gmra.mxu0 %v883
        %v974 = vpop.f32.mrf.mxu0
        %v975 = vadd.f32 0.0, %v974
        %v976 = vpop.f32.mrf.mxu0
        %v977 = vadd.f32 0.0, %v976
        %978 = vmatmul.bf16.gmra.mxu0 %v885
        %v979 = vpop.f32.mrf.mxu0
        %v980 = vadd.f32 0.0, %v979
        %v981 = vpop.f32.mrf.mxu0
        %v982 = vadd.f32 0.0, %v981
        %983 = vmatmul.bf16.gmra.mxu0 %v887
        %v984 = vpop.f32.mrf.mxu0
        %v985 = vadd.f32 0.0, %v984
        %v986 = vpop.f32.mrf.mxu0
        %v987 = vadd.f32 0.0, %v986
        %988 = vmatmul.bf16.gmra.mxu0 %v889
        %v989 = vpop.f32.mrf.mxu0
        %v990 = vadd.f32 0.0, %v989
        %v991 = vpop.f32.mrf.mxu0
        %v992 = vadd.f32 0.0, %v991
        %993 = vmatmul.bf16.gmra.mxu0 %v891
        %v994 = vpop.f32.mrf.mxu0
        %v995 = vadd.f32 0.0, %v994
        %v996 = vpop.f32.mrf.mxu0
        %v997 = vadd.f32 0.0, %v996
        %998 = vmatmul.bf16.gmra.mxu0 %v893
        %v999 = vpop.f32.mrf.mxu0
        %v1000 = vadd.f32 0.0, %v999
        %v1001 = vpop.f32.mrf.mxu0
        %v1002 = vadd.f32 0.0, %v1001
        %1003 = vmatmul.bf16.gmra.mxu0 %v895
        %v1004 = vpop.f32.mrf.mxu0
        %v1005 = vadd.f32 0.0, %v1004
        %v1006 = vpop.f32.mrf.mxu0
        %v1007 = vadd.f32 0.0, %v1006
        %1008 = vmatmul.bf16.gmra.mxu0 %v897
        %v1009 = vpop.f32.mrf.mxu0
        %v1010 = vadd.f32 0.0, %v1009
        %v1011 = vpop.f32.mrf.mxu0
        %v1012 = vadd.f32 0.0, %v1011
        %1013 = vmatmul.bf16.gmra.mxu0 %v899
        %v1014 = vpop.f32.mrf.mxu0
        %v1015 = vadd.f32 0.0, %v1014
        %v1016 = vpop.f32.mrf.mxu0
        %v1017 = vadd.f32 0.0, %v1016
        %1018 = vmatmul.bf16.gmra.mxu0 %v901
        %v1019 = vpop.f32.mrf.mxu0
        %v1020 = vadd.f32 0.0, %v1019
        %v1021 = vpop.f32.mrf.mxu0
        %v1022 = vadd.f32 0.0, %v1021
        %1023 = vdwg.mxu0
        %1024 = vmatpush.bf16.msra.mxu0 %v710
        %1025 = vmatpush.bf16.msra.mxu0 %v709
        %1026 = vmatpush.bf16.msra.mxu0 %v708
        %1027 = vmatpush.bf16.msra.mxu0 %v707
        %1028 = vmatpush.bf16.msra.mxu0 %v706
        %1029 = vmatpush.bf16.msra.mxu0 %v705
        %1030 = vmatpush.bf16.msra.mxu0 %v704
        %1031 = vmatpush.bf16.msra.mxu0 %v703
        %1032 = vmatmul.bf16.gmra.mxu0 %v872
        %v1033 = vpop.f32.mrf.mxu0
        %v1034 = vadd.f32 %v945, %v1033
        %v1035 = vpop.f32.mrf.mxu0
        %v1036 = vadd.f32 %v947, %v1035
        %1037 = vmatmul.bf16.gmra.mxu0 %v874
        %v1038 = vpop.f32.mrf.mxu0
        %v1039 = vadd.f32 %v950, %v1038
        %v1040 = vpop.f32.mrf.mxu0
        %v1041 = vadd.f32 %v952, %v1040
        %1042 = vmatmul.bf16.gmra.mxu0 %v876
        %v1043 = vpop.f32.mrf.mxu0
        %v1044 = vadd.f32 %v955, %v1043
        %v1045 = vpop.f32.mrf.mxu0
        %v1046 = vadd.f32 %v957, %v1045
        %1047 = vmatmul.bf16.gmra.mxu0 %v878
        %v1048 = vpop.f32.mrf.mxu0
        %v1049 = vadd.f32 %v960, %v1048
        %v1050 = vpop.f32.mrf.mxu0
        %v1051 = vadd.f32 %v962, %v1050
        %1052 = vmatmul.bf16.gmra.mxu0 %v880
        %v1053 = vpop.f32.mrf.mxu0
        %v1054 = vadd.f32 %v965, %v1053
        %v1055 = vpop.f32.mrf.mxu0
        %v1056 = vadd.f32 %v967, %v1055
        %1057 = vmatmul.bf16.gmra.mxu0 %v882
        %v1058 = vpop.f32.mrf.mxu0
        %v1059 = vadd.f32 %v970, %v1058
        %v1060 = vpop.f32.mrf.mxu0
        %v1061 = vadd.f32 %v972, %v1060
        %1062 = vmatmul.bf16.gmra.mxu0 %v884
        %v1063 = vpop.f32.mrf.mxu0
        %v1064 = vadd.f32 %v975, %v1063
        %v1065 = vpop.f32.mrf.mxu0
        %v1066 = vadd.f32 %v977, %v1065
        %1067 = vmatmul.bf16.gmra.mxu0 %v886
        %v1068 = vpop.f32.mrf.mxu0
        %v1069 = vadd.f32 %v980, %v1068
        %v1070 = vpop.f32.mrf.mxu0
        %v1071 = vadd.f32 %v982, %v1070
        %1072 = vmatmul.bf16.gmra.mxu0 %v888
        %v1073 = vpop.f32.mrf.mxu0
        %v1074 = vadd.f32 %v985, %v1073
        %v1075 = vpop.f32.mrf.mxu0
        %v1076 = vadd.f32 %v987, %v1075
        %1077 = vmatmul.bf16.gmra.mxu0 %v890
        %v1078 = vpop.f32.mrf.mxu0
        %v1079 = vadd.f32 %v990, %v1078
        %v1080 = vpop.f32.mrf.mxu0
        %v1081 = vadd.f32 %v992, %v1080
        %1082 = vmatmul.bf16.gmra.mxu0 %v892
        %v1083 = vpop.f32.mrf.mxu0
        %v1084 = vadd.f32 %v995, %v1083
        %v1085 = vpop.f32.mrf.mxu0
        %v1086 = vadd.f32 %v997, %v1085
        %1087 = vmatmul.bf16.gmra.mxu0 %v894
        %v1088 = vpop.f32.mrf.mxu0
        %v1089 = vadd.f32 %v1000, %v1088
        %v1090 = vpop.f32.mrf.mxu0
        %v1091 = vadd.f32 %v1002, %v1090
        %1092 = vmatmul.bf16.gmra.mxu0 %v896
        %v1093 = vpop.f32.mrf.mxu0
        %v1094 = vadd.f32 %v1005, %v1093
        %v1095 = vpop.f32.mrf.mxu0
        %v1096 = vadd.f32 %v1007, %v1095
        %1097 = vmatmul.bf16.gmra.mxu0 %v898
        %v1098 = vpop.f32.mrf.mxu0
        %v1099 = vadd.f32 %v1010, %v1098
        %v1100 = vpop.f32.mrf.mxu0
        %v1101 = vadd.f32 %v1012, %v1100
        %1102 = vmatmul.bf16.gmra.mxu0 %v900
        %v1103 = vpop.f32.mrf.mxu0
        %v1104 = vadd.f32 %v1015, %v1103
        %v1105 = vpop.f32.mrf.mxu0
        %v1106 = vadd.f32 %v1017, %v1105
        %1107 = vmatmul.bf16.gmra.mxu0 %v902
        %v1108 = vpop.f32.mrf.mxu0
        %v1109 = vadd.f32 %v1020, %v1108
        %v1110 = vpop.f32.mrf.mxu0
        %v1111 = vadd.f32 %v1022, %v1110
        %1112 = vdwg.mxu0
        %v1113 = vadd.f32 %v711, %v1034
        %v1114 = vadd.f32 %v712, %v1036
        %v1115 = vadd.f32 %v713, %v1039
        %v1116 = vadd.f32 %v714, %v1041
        %v1117 = vadd.f32 %v715, %v1044
        %v1118 = vadd.f32 %v716, %v1046
        %v1119 = vadd.f32 %v717, %v1049
        %v1120 = vadd.f32 %v718, %v1051
        %v1121 = vadd.f32 %v719, %v1054
        %v1122 = vadd.f32 %v720, %v1056
        %v1123 = vadd.f32 %v721, %v1059
        %v1124 = vadd.f32 %v722, %v1061
        %v1125 = vadd.f32 %v723, %v1064
        %v1126 = vadd.f32 %v724, %v1066
        %v1127 = vadd.f32 %v725, %v1069
        %v1128 = vadd.f32 %v726, %v1071
        %v1129 = vadd.f32 %v727, %v1074
        %v1130 = vadd.f32 %v728, %v1076
        %v1131 = vadd.f32 %v729, %v1079
        %v1132 = vadd.f32 %v730, %v1081
        %v1133 = vadd.f32 %v731, %v1084
        %v1134 = vadd.f32 %v732, %v1086
        %v1135 = vadd.f32 %v733, %v1089
        %v1136 = vadd.f32 %v734, %v1091
        %v1137 = vadd.f32 %v735, %v1094
        %v1138 = vadd.f32 %v736, %v1096
        %v1139 = vadd.f32 %v737, %v1099
        %v1140 = vadd.f32 %v738, %v1101
        %v1141 = vadd.f32 %v739, %v1104
        %v1142 = vadd.f32 %v740, %v1106
        %v1143 = vadd.f32 %v741, %v1109
        %v1144 = vadd.f32 %v742, %v1111
        %1145 = vst [vmem:[#allocation2] sm:$0xff] %v1113
        %1146 = vst [vmem:[#allocation2 + $0x8] sm:$0xff] %v1114
        %1147 = vst [vmem:[#allocation2 + $0x10] sm:$0xff] %v1115
        %1148 = vst [vmem:[#allocation2 + $0x18] sm:$0xff] %v1116
        %1149 = vst [vmem:[#allocation2 + $0x20] sm:$0xff] %v1117
        %1150 = vst [vmem:[#allocation2 + $0x28] sm:$0xff] %v1118
        %1151 = vst [vmem:[#allocation2 + $0x30] sm:$0xff] %v1119
        %1152 = vst [vmem:[#allocation2 + $0x38] sm:$0xff] %v1120
        %1153 = vst [vmem:[#allocation2 + $0x40] sm:$0xff] %v1121
        %1154 = vst [vmem:[#allocation2 + $0x48] sm:$0xff] %v1122
        %1155 = vst [vmem:[#allocation2 + $0x50] sm:$0xff] %v1123
        %1156 = vst [vmem:[#allocation2 + $0x58] sm:$0xff] %v1124
        %1157 = vst [vmem:[#allocation2 + $0x60] sm:$0xff] %v1125
        %1158 = vst [vmem:[#allocation2 + $0x68] sm:$0xff] %v1126
        %1159 = vst [vmem:[#allocation2 + $0x70] sm:$0xff] %v1127
        %1160 = vst [vmem:[#allocation2 + $0x78] sm:$0xff] %v1128
        %1161 = vst [vmem:[#allocation2 + $0x80] sm:$0xff] %v1129
        %1162 = vst [vmem:[#allocation2 + $0x88] sm:$0xff] %v1130
        %1163 = vst [vmem:[#allocation2 + $0x90] sm:$0xff] %v1131
        %1164 = vst [vmem:[#allocation2 + $0x98] sm:$0xff] %v1132
        %1165 = vst [vmem:[#allocation2 + $0xa0] sm:$0xff] %v1133
        %1166 = vst [vmem:[#allocation2 + $0xa8] sm:$0xff] %v1134
        %1167 = vst [vmem:[#allocation2 + $0xb0] sm:$0xff] %v1135
        %1168 = vst [vmem:[#allocation2 + $0xb8] sm:$0xff] %v1136
        %1169 = vst [vmem:[#allocation2 + $0xc0] sm:$0xff] %v1137
        %1170 = vst [vmem:[#allocation2 + $0xc8] sm:$0xff] %v1138
        %1171 = vst [vmem:[#allocation2 + $0xd0] sm:$0xff] %v1139
        %1172 = vst [vmem:[#allocation2 + $0xd8] sm:$0xff] %v1140
        %1173 = vst [vmem:[#allocation2 + $0xe0] sm:$0xff] %v1141
        %1174 = vst [vmem:[#allocation2 + $0xe8] sm:$0xff] %v1142
        %1175 = vst [vmem:[#allocation2 + $0xf0] sm:$0xff] %v1143
        %1176 = vst [vmem:[#allocation2 + $0xf8] sm:$0xff] %v1144
        %p1177 = scmp.eq.s32.totalorder %s20, 1
        // Predicated region
        $region79: #{gcn_forward.2} parent=69 // pred_check
          %p1178 = pneg %p1177
        $region80: #{gcn_forward.2} parent=69 // pred_check_branch
          %1180 = sbr.rel (%p1178) target = $region82
        $region81: #{gcn_forward.2} parent=69 // pred_region
          %v1181 = vld [vmem:[#allocation2] sm:$0xff]
          %v1182 = vld [vmem:[#allocation2 + $0x8] sm:$0xff]
          %v1183 = vld [vmem:[#allocation2 + $0x10] sm:$0xff]
          %v1184 = vld [vmem:[#allocation2 + $0x18] sm:$0xff]
          %v1185 = vld [vmem:[#allocation2 + $0x20] sm:$0xff]
          %v1186 = vld [vmem:[#allocation2 + $0x28] sm:$0xff]
          %v1187 = vld [vmem:[#allocation2 + $0x30] sm:$0xff]
          %v1188 = vld [vmem:[#allocation2 + $0x38] sm:$0xff]
          %v1189 = vld [vmem:[#allocation2 + $0x40] sm:$0xff]
          %v1190 = vld [vmem:[#allocation2 + $0x48] sm:$0xff]
          %v1191 = vld [vmem:[#allocation2 + $0x50] sm:$0xff]
          %v1192 = vld [vmem:[#allocation2 + $0x58] sm:$0xff]
          %v1193 = vld [vmem:[#allocation2 + $0x60] sm:$0xff]
          %v1194 = vld [vmem:[#allocation2 + $0x68] sm:$0xff]
          %v1195 = vld [vmem:[#allocation2 + $0x70] sm:$0xff]
          %v1196 = vld [vmem:[#allocation2 + $0x78] sm:$0xff]
          %v1197 = vld [vmem:[#allocation2 + $0x80] sm:$0xff]
          %v1198 = vld [vmem:[#allocation2 + $0x88] sm:$0xff]
          %v1199 = vld [vmem:[#allocation2 + $0x90] sm:$0xff]
          %v1200 = vld [vmem:[#allocation2 + $0x98] sm:$0xff]
          %v1201 = vld [vmem:[#allocation2 + $0xa0] sm:$0xff]
          %v1202 = vld [vmem:[#allocation2 + $0xa8] sm:$0xff]
          %v1203 = vld [vmem:[#allocation2 + $0xb0] sm:$0xff]
          %v1204 = vld [vmem:[#allocation2 + $0xb8] sm:$0xff]
          %v1205 = vld [vmem:[#allocation2 + $0xc0] sm:$0xff]
          %v1206 = vld [vmem:[#allocation2 + $0xc8] sm:$0xff]
          %v1207 = vld [vmem:[#allocation2 + $0xd0] sm:$0xff]
          %v1208 = vld [vmem:[#allocation2 + $0xd8] sm:$0xff]
          %v1209 = vld [vmem:[#allocation2 + $0xe0] sm:$0xff]
          %v1210 = vld [vmem:[#allocation2 + $0xe8] sm:$0xff]
          %v1211 = vld [vmem:[#allocation2 + $0xf0] sm:$0xff]
          %v1212 = vld [vmem:[#allocation2 + $0xf8] sm:$0xff]
          %v1213 = vld [vmem:[%s3] sm:$0x1]
          %v1215 = vperm.slane %v1213, 0
          %v1217 = vadd.f32 %v1181, %v1215
          %v1218 = vadd.f32 %v1182, %v1215
          %v1219 = vadd.f32 %v1183, %v1215
          %v1220 = vadd.f32 %v1184, %v1215
          %v1221 = vadd.f32 %v1185, %v1215
          %v1222 = vadd.f32 %v1186, %v1215
          %v1223 = vadd.f32 %v1187, %v1215
          %v1224 = vadd.f32 %v1188, %v1215
          %v1225 = vadd.f32 %v1189, %v1215
          %v1226 = vadd.f32 %v1190, %v1215
          %v1227 = vadd.f32 %v1191, %v1215
          %v1228 = vadd.f32 %v1192, %v1215
          %v1229 = vadd.f32 %v1193, %v1215
          %v1230 = vadd.f32 %v1194, %v1215
          %v1231 = vadd.f32 %v1195, %v1215
          %v1232 = vadd.f32 %v1196, %v1215
          %v1233 = vadd.f32 %v1197, %v1215
          %v1234 = vadd.f32 %v1198, %v1215
          %v1235 = vadd.f32 %v1199, %v1215
          %v1236 = vadd.f32 %v1200, %v1215
          %v1237 = vadd.f32 %v1201, %v1215
          %v1238 = vadd.f32 %v1202, %v1215
          %v1239 = vadd.f32 %v1203, %v1215
          %v1240 = vadd.f32 %v1204, %v1215
          %v1241 = vadd.f32 %v1205, %v1215
          %v1242 = vadd.f32 %v1206, %v1215
          %v1243 = vadd.f32 %v1207, %v1215
          %v1244 = vadd.f32 %v1208, %v1215
          %v1245 = vadd.f32 %v1209, %v1215
          %v1246 = vadd.f32 %v1210, %v1215
          %v1247 = vadd.f32 %v1211, %v1215
          %v1248 = vadd.f32 %v1212, %v1215
          %v1249 = vmax.f32 %v1217, 0.0
          %v1250 = vmax.f32 %v1218, 0.0
          %v1251 = vmax.f32 %v1219, 0.0
          %v1252 = vmax.f32 %v1220, 0.0
          %v1253 = vmax.f32 %v1221, 0.0
          %v1254 = vmax.f32 %v1222, 0.0
          %v1255 = vmax.f32 %v1223, 0.0
          %v1256 = vmax.f32 %v1224, 0.0
          %v1257 = vmax.f32 %v1225, 0.0
          %v1258 = vmax.f32 %v1226, 0.0
          %v1259 = vmax.f32 %v1227, 0.0
          %v1260 = vmax.f32 %v1228, 0.0
          %v1261 = vmax.f32 %v1229, 0.0
          %v1262 = vmax.f32 %v1230, 0.0
          %v1263 = vmax.f32 %v1231, 0.0
          %v1264 = vmax.f32 %v1232, 0.0
          %v1265 = vmax.f32 %v1233, 0.0
          %v1266 = vmax.f32 %v1234, 0.0
          %v1267 = vmax.f32 %v1235, 0.0
          %v1268 = vmax.f32 %v1236, 0.0
          %v1269 = vmax.f32 %v1237, 0.0
          %v1270 = vmax.f32 %v1238, 0.0
          %v1271 = vmax.f32 %v1239, 0.0
          %v1272 = vmax.f32 %v1240, 0.0
          %v1273 = vmax.f32 %v1241, 0.0
          %v1274 = vmax.f32 %v1242, 0.0
          %v1275 = vmax.f32 %v1243, 0.0
          %v1276 = vmax.f32 %v1244, 0.0
          %v1277 = vmax.f32 %v1245, 0.0
          %v1278 = vmax.f32 %v1246, 0.0
          %v1279 = vmax.f32 %v1247, 0.0
          %v1280 = vmax.f32 %v1248, 0.0
          %v1281 = vpack.c.bf16 %v1249, %v1249
          %v1282 = vpack.c.bf16 %v1250, %v1250
          %v1283 = vpack.c.bf16 %v1251, %v1251
          %v1284 = vpack.c.bf16 %v1252, %v1252
          %v1285 = vpack.c.bf16 %v1253, %v1253
          %v1286 = vpack.c.bf16 %v1254, %v1254
          %v1287 = vpack.c.bf16 %v1255, %v1255
          %v1288 = vpack.c.bf16 %v1256, %v1256
          %v1289 = vpack.c.bf16 %v1257, %v1257
          %v1290 = vpack.c.bf16 %v1258, %v1258
          %v1291 = vpack.c.bf16 %v1259, %v1259
          %v1292 = vpack.c.bf16 %v1260, %v1260
          %v1293 = vpack.c.bf16 %v1261, %v1261
          %v1294 = vpack.c.bf16 %v1262, %v1262
          %v1295 = vpack.c.bf16 %v1263, %v1263
          %v1296 = vpack.c.bf16 %v1264, %v1264
          %v1297 = vpack.c.bf16 %v1265, %v1265
          %v1298 = vpack.c.bf16 %v1266, %v1266
          %v1299 = vpack.c.bf16 %v1267, %v1267
          %v1300 = vpack.c.bf16 %v1268, %v1268
          %v1301 = vpack.c.bf16 %v1269, %v1269
          %v1302 = vpack.c.bf16 %v1270, %v1270
          %v1303 = vpack.c.bf16 %v1271, %v1271
          %v1304 = vpack.c.bf16 %v1272, %v1272
          %v1305 = vpack.c.bf16 %v1273, %v1273
          %v1306 = vpack.c.bf16 %v1274, %v1274
          %v1307 = vpack.c.bf16 %v1275, %v1275
          %v1308 = vpack.c.bf16 %v1276, %v1276
          %v1309 = vpack.c.bf16 %v1277, %v1277
          %v1310 = vpack.c.bf16 %v1278, %v1278
          %v1311 = vpack.c.bf16 %v1279, %v1279
          %v1312 = vpack.c.bf16 %v1280, %v1280
          %1313 = vst [vmem:[%s398] sm:$0xf] %v1281
          %1314 = vst [vmem:[%s398 + $0x4] sm:$0xf] %v1282
          %1315 = vst [vmem:[%s398 + $0x8] sm:$0xf] %v1283
          %1316 = vst [vmem:[%s398 + $0xc] sm:$0xf] %v1284
          %1317 = vst [vmem:[%s398 + $0x10] sm:$0xf] %v1285
          %1318 = vst [vmem:[%s398 + $0x14] sm:$0xf] %v1286
          %1319 = vst [vmem:[%s398 + $0x18] sm:$0xf] %v1287
          %1320 = vst [vmem:[%s398 + $0x1c] sm:$0xf] %v1288
          %1321 = vst [vmem:[%s398 + $0x20] sm:$0xf] %v1289
          %1322 = vst [vmem:[%s398 + $0x24] sm:$0xf] %v1290
          %1323 = vst [vmem:[%s398 + $0x28] sm:$0xf] %v1291
          %1324 = vst [vmem:[%s398 + $0x2c] sm:$0xf] %v1292
          %1325 = vst [vmem:[%s398 + $0x30] sm:$0xf] %v1293
          %1326 = vst [vmem:[%s398 + $0x34] sm:$0xf] %v1294
          %1327 = vst [vmem:[%s398 + $0x38] sm:$0xf] %v1295
          %1328 = vst [vmem:[%s398 + $0x3c] sm:$0xf] %v1296
          %1329 = vst [vmem:[%s398 + $0x40] sm:$0xf] %v1297
          %1330 = vst [vmem:[%s398 + $0x44] sm:$0xf] %v1298
          %1331 = vst [vmem:[%s398 + $0x48] sm:$0xf] %v1299
          %1332 = vst [vmem:[%s398 + $0x4c] sm:$0xf] %v1300
          %1333 = vst [vmem:[%s398 + $0x50] sm:$0xf] %v1301
          %1334 = vst [vmem:[%s398 + $0x54] sm:$0xf] %v1302
          %1335 = vst [vmem:[%s398 + $0x58] sm:$0xf] %v1303
          %1336 = vst [vmem:[%s398 + $0x5c] sm:$0xf] %v1304
          %1337 = vst [vmem:[%s398 + $0x60] sm:$0xf] %v1305
          %1338 = vst [vmem:[%s398 + $0x64] sm:$0xf] %v1306
          %1339 = vst [vmem:[%s398 + $0x68] sm:$0xf] %v1307
          %1340 = vst [vmem:[%s398 + $0x6c] sm:$0xf] %v1308
          %1341 = vst [vmem:[%s398 + $0x70] sm:$0xf] %v1309
          %1342 = vst [vmem:[%s398 + $0x74] sm:$0xf] %v1310
          %1343 = vst [vmem:[%s398 + $0x78] sm:$0xf] %v1311
          %1344 = vst [vmem:[%s398 + $0x7c] sm:$0xf] %v1312
        $region82: #{gcn_forward.2} parent=69 // pred_fallthru
          _
        %s1345 = smul.u32 32, %s19
        %p1346 = scmp.lt.s32.totalorder %s1345, 63
        %s1347 = scalar_select %p1346, %s1345, 63
        %s1348 = smul.addr %s1347, 4
        %s1349 = scalar_lea.vmem %s4, %s1348
        // Predicated region
        $region83: #{gcn_forward.2} parent=69 // pred_check
          %p1350 = pneg %p141
        $region84: #{gcn_forward.2} parent=69 // pred_check_branch
          %1352 = sbr.rel (%p1350) target = $region86
        $region85: #{gcn_forward.2} parent=69 // pred_region
          %s1353 = smul.u32 32, %s19
        $region86: #{gcn_forward.2} parent=69 // pred_fallthru
          _
      $region70: #{gcn_forward.2} parent=5 // pred_fallthru
        _
      %p1354 = scmp.le.s32.totalorder 2, %s10
      // Predicated region
      $region87: #{gcn_forward.2} parent=5 // pred_check
        %p1355 = pneg %p1354
      $region88: #{gcn_forward.2} parent=5 // pred_check_branch
        %1357 = sbr.rel (%p1355) target = $region90
      $region89: #{gcn_forward.2} parent=5 // pred_region
        %s1358 = ssub.s32 %s10, 2
        // Predicated region
        $region91: #{gcn_forward.2} parent=89 // pred_check
          %p1359 = pneg %p147
        $region92: #{gcn_forward.2} parent=89 // pred_check_branch
          %1361 = sbr.rel (%p1359) target = $region94
        $region93: #{gcn_forward.2} parent=89 // pred_region
          %s1362 = smul.u32 32, %s21
          %p1363 = scmp.lt.s32.totalorder %s1362, 63
          %s1364 = scalar_select %p1363, %s1362, 63
          %s1365 = smul.addr %s1364, 4
          %s1366 = scalar_lea.vmem %s4, %s1365
        $region94: #{gcn_forward.2} parent=89 // pred_fallthru
          _
      $region90: #{gcn_forward.2} parent=5 // pred_fallthru
        _
    $region6: #{gcn_forward.2} parent=1 // loop_footer
      %s14 = sadd.s32 1, %s10
    $region7: #{gcn_forward.2} parent=1 // loop_footer_branch
      %9 = sbr.rel target = $region3
    $region8: #{gcn_forward.2} parent=1 // loop_exit
      _

</llo_original>
